<compile_context>
chip_gen: v5e
topology: v5e:2x2
jax: 0.10.0
libtpu: 0.0.40
codegen_flags: <defaults>
</compile_context>

<pallas_src>
import functools
import math

import jax
import jax.numpy as jnp
from jax import lax
from jax.experimental import pallas as pl
from jax.experimental.pallas import tpu as pltpu


def _round_up(x, m):
    return ((x + m - 1) // m) * m


def _pad_cols(w, cols):
    pad = cols - w.shape[1]
    return w if pad == 0 else jnp.pad(w, ((0, 0), (0, pad)))


def _largest_divisor(n, limit, align):
    """Largest d with d | n, d <= limit, d % align == 0; None if no such d."""
    d = (min(n, limit) // align) * align
    while d >= align:
        if n % d == 0:
            return d
        d -= align
    return None


# --------------------- fused projection + flash attention body ---------------------

def _attn_body(bias_ref, xq_ref, xkv_ref, wq_ref, wkv_ref, o_ref,
               q_sc, m_sc, l_sc, acc_sc, *, dqk_p, tile_valid):
    ki = pl.program_id(2)

    @pl.when(ki == 0)
    def _init():
        m_sc[...] = jnp.full_like(m_sc, -jnp.inf)
        l_sc[...] = jnp.zeros_like(l_sc)
        acc_sc[...] = jnp.zeros_like(acc_sc)
        # Q projection once per q-tile; 1/sqrt(dim_qk) is folded into wq.
        q = jnp.dot(xq_ref[0], wq_ref[...], preferred_element_type=jnp.float32)
        q_sc[...] = q.astype(q_sc.dtype)                       # bf16 MXU operand

    def _compute():
        # K/V projection for this kv-tile (weights resident in VMEM).
        kv = jnp.dot(xkv_ref[0], wkv_ref[...], preferred_element_type=jnp.float32)
        k = kv[:, :dqk_p].astype(jnp.bfloat16)                 # (tk, dqk_p)
        v = kv[:, dqk_p:].astype(jnp.bfloat16)                 # (tk, dv_p)

        # q @ k^T via trans-b contraction (no XLU transpose), bf16 in / f32 out.
        s = lax.dot_general(q_sc[...], k, (((1,), (1,)), ((), ())),
                            preferred_element_type=jnp.float32)  # (tq, tk) f32
        if bias_ref is not None:
            s = s + bias_ref[...]                              # (1, tk) -> broadcast

        # Online softmax update, all elementwise math in f32.
        m_prev = m_sc[...]
        m_new = jnp.maximum(m_prev, jnp.max(s, axis=-1, keepdims=True))
        alpha = jnp.exp(m_prev - m_new)
        p = jnp.exp(s - m_new)
        l_sc[...] = alpha * l_sc[...] + jnp.sum(p, axis=-1, keepdims=True)
        acc_sc[...] = alpha * acc_sc[...] + jnp.dot(p.astype(jnp.bfloat16), v,
                                                    preferred_element_type=jnp.float32)
        m_sc[...] = m_new

    if tile_valid is None:
        _compute()
    else:
        pl.when(tile_valid)(_compute)   # skip fully-masked / fully-padded kv tiles

    @pl.when(ki == pl.num_programs(2) - 1)
    def _fin():
        inv_l = pl.reciprocal(l_sc[...], approx=True)
        o_ref[0] = (acc_sc[...] * inv_l).astype(o_ref.dtype)


def _attn_kernel_nomask(xq_ref, xkv_ref, wq_ref, wkv_ref, o_ref,
                        q_sc, m_sc, l_sc, acc_sc, *, dqk_p):
    _attn_body(None, xq_ref, xkv_ref, wq_ref, wkv_ref, o_ref,
               q_sc, m_sc, l_sc, acc_sc, dqk_p=dqk_p, tile_valid=None)


def _attn_kernel_masked(flags_ref, bias_ref, xq_ref, xkv_ref, wq_ref, wkv_ref, o_ref,
                        q_sc, m_sc, l_sc, acc_sc, *, dqk_p):
    ki = pl.program_id(2)
    _attn_body(bias_ref, xq_ref, xkv_ref, wq_ref, wkv_ref, o_ref,
               q_sc, m_sc, l_sc, acc_sc, dqk_p=dqk_p,
               tile_valid=flags_ref[ki] != 0)


# ------------------------------------ wrapper ------------------------------------

def self_attention_withpad(x, wq, wk, wv, key_mask=None, *, q_tile=512, kv_tile=1024):
    """Single-head self-attention with an optional key-padding mask.

    x: (B, N, E); wq/wk: (E, Dqk); wv: (E, Dv).
    key_mask: optional (N,) or (1, N) vector, 0 = padded key (masked out), which
    matches the module's padding-mask usage (mask broadcast over query rows).
    """
    # TODO(synk): arbitrary per-query (N, N) masks are not supported here; only the
    # key-padding form (the module's "Withpad" use case) is implemented.
    B, N, E = x.shape
    Dqk = wq.shape[1]
    Dv = wv.shape[1]
    norm_fact = 1.0 / math.sqrt(Dqk)

    # Lane-dense padded head dims (zero columns are stripped at the end).
    dqk_p = _round_up(Dqk, 128)
    dv_p = _round_up(Dv, 128)

    # ---- tile selection: pad N up to a tile multiple instead of huge fallback blocks
    tk = min(kv_tile, _round_up(N, 128))             # multiple of 128
    n_pad = _round_up(N, tk)
    tq = _largest_divisor(tk, limit=q_tile, align=16)  # multiple of 16, divides n_pad
    # v7x has 2 TensorCores: make sure the parallel axes (B, qi) give >= 2 blocks.
    if B * (n_pad // tq) < 2:
        alt = _largest_divisor(tk, limit=tq // 2, align=16)
        if alt is not None:
            tq = alt

    x_p = x if n_pad == N else jnp.pad(x, ((0, 0), (0, n_pad - N), (0, 0)))

    # Fold 1/sqrt(dim_qk) into the Q weights; fuse K and V weights into one matmul.
    wq_s = _pad_cols(wq * jnp.float32(norm_fact), dqk_p)          # (E, dqk_p)
    wkv = jnp.concatenate([_pad_cols(wk, dqk_p), _pad_cols(wv, dv_p)], axis=1)

    grid = (B, n_pad // tq, n_pad // tk)
    scratch = [pltpu.VMEM((tq, dqk_p), jnp.bfloat16),   # cached Q tile (bf16 MXU operand)
               pltpu.VMEM((tq, 1), jnp.float32),        # running row max
               pltpu.VMEM((tq, 1), jnp.float32),        # running softmax denominator
               pltpu.VMEM((tq, dv_p), jnp.float32)]     # output accumulator
    out_shape = jax.ShapeDtypeStruct((B, n_pad, dv_p), x.dtype)
    params = pltpu.CompilerParams(
        dimension_semantics=("parallel", "parallel", "arbitrary"))

    need_mask = (key_mask is not None) or (n_pad != N)

    if not need_mask:
        xq_spec = pl.BlockSpec((1, tq, E), lambda b, qi, ki: (b, qi, 0))
        xkv_spec = pl.BlockSpec((1, tk, E), lambda b, qi, ki: (b, ki, 0))
        wq_spec = pl.BlockSpec((E, dqk_p), lambda b, qi, ki: (0, 0))
        wkv_spec = pl.BlockSpec((E, dqk_p + dv_p), lambda b, qi, ki: (0, 0))
        o_spec = pl.BlockSpec((1, tq, dv_p), lambda b, qi, ki: (b, qi, 0))
        out_p = pl.pallas_call(
            functools.partial(_attn_kernel_nomask, dqk_p=dqk_p),
            out_shape=out_shape,
            grid_spec=pltpu.PrefetchScalarGridSpec(
                num_scalar_prefetch=0, grid=grid,
                in_specs=[xq_spec, xkv_spec, wq_spec, wkv_spec],
                out_specs=o_spec, scratch_shapes=scratch),
            compiler_params=params,
        )(x_p, x_p, wq_s, wkv)
    else:
        if key_mask is None:
            key_valid = jnp.ones((N,), jnp.float32)
        else:
            key_valid = (key_mask.reshape(N) != 0).astype(jnp.float32)
        key_valid = jnp.pad(key_valid, (0, n_pad - N))            # padded keys invalid
        # Additive bias: 0 where attended, -1e30 where masked/padded.
        # Note: a row with ALL keys masked produces inf/NaN (torch also yields NaN).
        bias = jnp.where(key_valid > 0, 0.0, -1e30).astype(jnp.float32).reshape(1, n_pad)
        # Per-kv-tile "has any valid key" flags (scalar-prefetched into SMEM).
        kv_flags = (jnp.max(key_valid.reshape(n_pad // tk, tk), axis=1) > 0
                    ).astype(jnp.int32)

        bias_spec = pl.BlockSpec((1, tk), lambda b, qi, ki, flags: (0, ki))
        xq_spec = pl.BlockSpec((1, tq, E), lambda b, qi, ki, flags: (b, qi, 0))
        xkv_spec = pl.BlockSpec((1, tk, E), lambda b, qi, ki, flags: (b, ki, 0))
        wq_spec = pl.BlockSpec((E, dqk_p), lambda b, qi, ki, flags: (0, 0))
        wkv_spec = pl.BlockSpec((E, dqk_p + dv_p), lambda b, qi, ki, flags: (0, 0))
        o_spec = pl.BlockSpec((1, tq, dv_p), lambda b, qi, ki, flags: (b, qi, 0))
        out_p = pl.pallas_call(
            functools.partial(_attn_kernel_masked, dqk_p=dqk_p),
            out_shape=out_shape,
            grid_spec=pltpu.PrefetchScalarGridSpec(
                num_scalar_prefetch=1, grid=grid,
                in_specs=[bias_spec, xq_spec, xkv_spec, wq_spec, wkv_spec],
                out_specs=o_spec, scratch_shapes=scratch),
            compiler_params=params,
        )(kv_flags, bias, x_p, x_p, wq_s, wkv)

    out = out_p
    if n_pad != N:
        out = out[:, :N, :]
    if dv_p != Dv:
        out = out[:, :, :Dv]
    return out


# ----------------------------------- reference -----------------------------------

def _reference(x, wq, wk, wv, key_mask=None):
    q = x @ wq
    k = x @ wk
    v = x @ wv
    score = jnp.einsum("bnd,bmd->bnm", q, k) / math.sqrt(wq.shape[1])
    if key_mask is not None:
        score = jnp.where(key_mask[None, None, :] == 0, -jnp.inf, score)
    p = jax.nn.softmax(score, axis=-1)
    return jnp.einsum("bnm,bmd->bnd", p, v)


if __name__ == "__main__":
    # Small shapes: batch=2, seq=8, dim_embedding=32, dim_qk=16, dim_v=16
    B, N, E, DQK, DV = 2, 8, 32, 16, 16

    key = jax.random.PRNGKey(0)
    kx, kq, kk, kv, kx2 = jax.random.split(key, 5)

    x = jax.random.normal(kx, (B, N, E), dtype=jnp.float32)

    # nn.Linear-style init: U(-1/sqrt(in), 1/sqrt(in)), no bias.
    # PyTorch weights are (out, in); we store (in, out) so the kernel does x @ W.
    bound = 1.0 / math.sqrt(E)
    wq = jax.random.uniform(kq, (E, DQK), jnp.float32, -bound, bound)
    wk = jax.random.uniform(kk, (E, DQK), jnp.float32, -bound, bound)
    wv = jax.random.uniform(kv, (E, DV), jnp.float32, -bound, bound)

    # bf16 MXU operands with f32 accumulation -> slightly loosened tolerances.
    ATOL = RTOL = 2e-2

    # --- default module config: mask=None (sequence gets tile-padded internally) ---
    out = jax.block_until_ready(self_attention_withpad(x, wq, wk, wv, key_mask=None))
    ref = _reference(x, wq, wk, wv, key_mask=None)
    assert out.shape == (B, N, DV)
    assert jnp.allclose(out, ref, atol=ATOL, rtol=RTOL), "mismatch vs reference (no mask)"

    # --- padding-mask path: last 3 keys are padding (no fully-masked rows) ---
    key_mask = jnp.ones((N,), dtype=jnp.int32).at[N - 3:].set(0)
    out_m = jax.block_until_ready(self_attention_withpad(x, wq, wk, wv, key_mask=key_mask))
    ref_m = _reference(x, wq, wk, wv, key_mask=key_mask)
    assert out_m.shape == (B, N, DV)
    assert jnp.allclose(out_m, ref_m, atol=ATOL, rtol=RTOL), "mismatch vs reference (masked)"

    # --- tile-aligned sequence: exercises the unmasked / unpadded kernel variant ---
    N2 = 128
    x2 = jax.random.normal(kx2, (B, N2, E), dtype=jnp.float32)
    out2 = jax.block_until_ready(self_attention_withpad(x2, wq, wk, wv, key_mask=None))
    ref2 = _reference(x2, wq, wk, wv, key_mask=None)
    assert out2.shape == (B, N2, DV)
    assert jnp.allclose(out2, ref2, atol=ATOL, rtol=RTOL), "mismatch vs reference (N=128)"

    print("KERNEL_OK")
</pallas_src>

<mosaic_0001>
module attributes {stable_mosaic.version = 11 : i64} {
  func.func @_attn_kernel_masked(%arg0: i32, %arg1: i32, %arg2: i32, %arg3: memref<1xi32, #tpu.memory_space<smem>>, %arg4: memref<1x128xf32, #tpu.memory_space<vmem>>, %arg5: memref<1x128x32xf32, #tpu.memory_space<vmem>>, %arg6: memref<1x128x32xf32, #tpu.memory_space<vmem>>, %arg7: memref<32x128xf32, #tpu.memory_space<vmem>>, %arg8: memref<32x256xf32, #tpu.memory_space<vmem>>, %arg9: memref<1x128x128xf32, #tpu.memory_space<vmem>>, %arg10: memref<128x128xbf16, #tpu.memory_space<vmem>>, %arg11: memref<128x1xf32, #tpu.memory_space<vmem>>, %arg12: memref<128x1xf32, #tpu.memory_space<vmem>>, %arg13: memref<128x128xf32, #tpu.memory_space<vmem>>) attributes {dimension_semantics = [#tpu.dimension_semantics<parallel>, #tpu.dimension_semantics<parallel>, #tpu.dimension_semantics<arbitrary>], iteration_bounds = array<i64: 2, 1, 1>, scalar_prefetch = 1 : i64, scratch_operands = 4 : i64, tpu.core_type = #tpu.core_type<tc>, window_params = [{transform_indices = @transform_0, window_bounds = array<i64: 1, 128>}, {transform_indices = @transform_1, window_bounds = array<i64: 1, 128, 32>}, {transform_indices = @transform_2, window_bounds = array<i64: 1, 128, 32>}, {pipeline_mode = #tpu.pipeline_mode<synchronous>, transform_indices = @transform_3, window_bounds = array<i64: 32, 128>}, {pipeline_mode = #tpu.pipeline_mode<synchronous>, transform_indices = @transform_4, window_bounds = array<i64: 32, 256>}, {transform_indices = @transform_5, window_bounds = array<i64: 1, 128, 128>}]} {
    %0 = arith.index_cast %arg2 : i32 to index
    %1 = memref.load %arg3[%0] : memref<1xi32, #tpu.memory_space<smem>>
    %c0_i32 = arith.constant 0 : i32
    %2 = arith.cmpi ne, %1, %c0_i32 : i32
    %c0_i32_0 = arith.constant 0 : i32
    %3 = arith.cmpi eq, %arg2, %c0_i32_0 : i32
    %4 = arith.extui %3 : i1 to i32
    %c0_i32_1 = arith.constant 0 : i32
    %5 = arith.cmpi ne, %4, %c0_i32_1 : i32
    scf.if %5 {
      %cst = arith.constant 0xFF800000 : f32
      %11 = vector.broadcast %cst : f32 to vector<128x1xf32>
      %c0 = arith.constant 0 : index
      %c0_5 = arith.constant 0 : index
      %12 = vector.load %arg11[%c0, %c0_5] : memref<128x1xf32, #tpu.memory_space<vmem>>, vector<128x1xf32>
      tpu.vector_store %arg11[%c0, %c0_5], %11 {strides = array<i32>} : memref<128x1xf32, #tpu.memory_space<vmem>>, vector<128x1xf32>,
      %cst_6 = arith.constant 0.000000e+00 : f32
      %13 = vector.broadcast %cst_6 : f32 to vector<128x1xf32>
      %c0_7 = arith.constant 0 : index
      %c0_8 = arith.constant 0 : index
      %14 = vector.load %arg12[%c0_7, %c0_8] : memref<128x1xf32, #tpu.memory_space<vmem>>, vector<128x1xf32>
      tpu.vector_store %arg12[%c0_7, %c0_8], %13 {strides = array<i32>} : memref<128x1xf32, #tpu.memory_space<vmem>>, vector<128x1xf32>,
      %cst_9 = arith.constant 0.000000e+00 : f32
      %15 = vector.broadcast %cst_9 : f32 to vector<128x128xf32>
      %c0_10 = arith.constant 0 : index
      %c0_11 = arith.constant 0 : index
      %16 = vector.load %arg13[%c0_10, %c0_11] : memref<128x128xf32, #tpu.memory_space<vmem>>, vector<128x128xf32>
      tpu.vector_store %arg13[%c0_10, %c0_11], %15 {strides = array<i32>} : memref<128x128xf32, #tpu.memory_space<vmem>>, vector<128x128xf32>,
      %c0_12 = arith.constant 0 : index
      %c0_13 = arith.constant 0 : index
      %c0_14 = arith.constant 0 : index
      %17 = vector.load %arg5[%c0_12, %c0_13, %c0_14] : memref<1x128x32xf32, #tpu.memory_space<vmem>>, vector<1x128x32xf32>
      %18 = vector.shape_cast %17 : vector<1x128x32xf32> to vector<128x32xf32>
      %c0_15 = arith.constant 0 : index
      %c0_16 = arith.constant 0 : index
      %19 = vector.load %arg7[%c0_15, %c0_16] : memref<32x128xf32, #tpu.memory_space<vmem>>, vector<32x128xf32>
      %cst_17 = arith.constant dense<0.000000e+00> : vector<128x128xf32>
      %20 = tpu.matmul %18, %19, %cst_17 {dimension_numbers = #tpu.dot_dimension_numbers<[1], [0], [0], [1], [0, 0, 1, 1], [], []>} : vector<128x32xf32>, vector<32x128xf32>, vector<128x128xf32> -> vector<128x128xf32>
      %21 = arith.truncf %20 : vector<128x128xf32> to vector<128x128xbf16>
      %c0_18 = arith.constant 0 : index
      %c0_19 = arith.constant 0 : index
      %22 = vector.load %arg10[%c0_18, %c0_19] : memref<128x128xbf16, #tpu.memory_space<vmem>>, vector<128x128xbf16>
      tpu.vector_store %arg10[%c0_18, %c0_19], %21 {strides = array<i32>} : memref<128x128xbf16, #tpu.memory_space<vmem>>, vector<128x128xbf16>,
    } else {
    }
    %6 = arith.extui %2 : i1 to i32
    %c0_i32_2 = arith.constant 0 : i32
    %7 = arith.cmpi ne, %6, %c0_i32_2 : i32
    scf.if %7 {
      %c0 = arith.constant 0 : index
      %c0_5 = arith.constant 0 : index
      %c0_6 = arith.constant 0 : index
      %11 = vector.load %arg6[%c0, %c0_5, %c0_6] : memref<1x128x32xf32, #tpu.memory_space<vmem>>, vector<1x128x32xf32>
      %12 = vector.shape_cast %11 : vector<1x128x32xf32> to vector<128x32xf32>
      %c0_7 = arith.constant 0 : index
      %c0_8 = arith.constant 0 : index
      %13 = vector.load %arg8[%c0_7, %c0_8] : memref<32x256xf32, #tpu.memory_space<vmem>>, vector<32x256xf32>
      %cst = arith.constant dense<0.000000e+00> : vector<128x256xf32>
      %14 = tpu.matmul %12, %13, %cst {dimension_numbers = #tpu.dot_dimension_numbers<[1], [0], [0], [1], [0, 0, 1, 1], [], []>} : vector<128x32xf32>, vector<32x256xf32>, vector<128x256xf32> -> vector<128x256xf32>
      %15 = vector.extract_strided_slice %14 {offsets = [0, 0], sizes = [128, 128], strides = [1, 1]} : vector<128x256xf32> to vector<128x128xf32>
      %16 = arith.truncf %15 : vector<128x128xf32> to vector<128x128xbf16>
      %17 = vector.extract_strided_slice %14 {offsets = [0, 128], sizes = [128, 128], strides = [1, 1]} : vector<128x256xf32> to vector<128x128xf32>
      %18 = arith.truncf %17 : vector<128x128xf32> to vector<128x128xbf16>
      %c0_9 = arith.constant 0 : index
      %c0_10 = arith.constant 0 : index
      %19 = vector.load %arg10[%c0_9, %c0_10] : memref<128x128xbf16, #tpu.memory_space<vmem>>, vector<128x128xbf16>
      %cst_11 = arith.constant dense<0.000000e+00> : vector<128x128xf32>
      %20 = tpu.matmul %19, %16, %cst_11 {dimension_numbers = #tpu.dot_dimension_numbers<[1], [1], [0], [0], [0, 0, 1, 0], [], []>} : vector<128x128xbf16>, vector<128x128xbf16>, vector<128x128xf32> -> vector<128x128xf32>
      %c0_12 = arith.constant 0 : index
      %c0_13 = arith.constant 0 : index
      %21 = vector.load %arg4[%c0_12, %c0_13] : memref<1x128xf32, #tpu.memory_space<vmem>>, vector<1x128xf32>
      %22 = vector.broadcast %21 : vector<1x128xf32> to vector<128x128xf32>
      %23 = arith.addf %20, %22 : vector<128x128xf32>
      %c0_14 = arith.constant 0 : index
      %c0_15 = arith.constant 0 : index
      %24 = vector.load %arg11[%c0_14, %c0_15] : memref<128x1xf32, #tpu.memory_space<vmem>>, vector<128x1xf32>
      %cst_16 = arith.constant dense<0xFF800000> : vector<128xf32>
      %25 = vector.multi_reduction <maximumf>, %23, %cst_16 [1] : vector<128x128xf32> to vector<128xf32>
      %26 = vector.shape_cast %25 : vector<128xf32> to vector<128x1xf32>
      %27 = arith.maximumf %24, %26 : vector<128x1xf32>
      %28 = arith.subf %24, %27 : vector<128x1xf32>
      %29 = math.exp %28 : vector<128x1xf32>
      %30 = vector.broadcast %27 : vector<128x1xf32> to vector<128x128xf32>
      %31 = arith.subf %23, %30 : vector<128x128xf32>
      %32 = math.exp %31 : vector<128x128xf32>
      %c0_17 = arith.constant 0 : index
      %c0_18 = arith.constant 0 : index
      %33 = vector.load %arg12[%c0_17, %c0_18] : memref<128x1xf32, #tpu.memory_space<vmem>>, vector<128x1xf32>
      %34 = arith.mulf %29, %33 : vector<128x1xf32>
      %cst_19 = arith.constant dense<0.000000e+00> : vector<128xf32>
      %35 = vector.multi_reduction <add>, %32, %cst_19 [1] : vector<128x128xf32> to vector<128xf32>
      %36 = vector.shape_cast %35 : vector<128xf32> to vector<128x1xf32>
      %37 = arith.addf %34, %36 : vector<128x1xf32>
      %c0_20 = arith.constant 0 : index
      %c0_21 = arith.constant 0 : index
      %38 = vector.load %arg12[%c0_20, %c0_21] : memref<128x1xf32, #tpu.memory_space<vmem>>, vector<128x1xf32>
      tpu.vector_store %arg12[%c0_20, %c0_21], %37 {strides = array<i32>} : memref<128x1xf32, #tpu.memory_space<vmem>>, vector<128x1xf32>,
      %c0_22 = arith.constant 0 : index
      %c0_23 = arith.constant 0 : index
      %39 = vector.load %arg13[%c0_22, %c0_23] : memref<128x128xf32, #tpu.memory_space<vmem>>, vector<128x128xf32>
      %40 = vector.broadcast %29 : vector<128x1xf32> to vector<128x128xf32>
      %41 = arith.mulf %40, %39 : vector<128x128xf32>
      %42 = arith.truncf %32 : vector<128x128xf32> to vector<128x128xbf16>
      %cst_24 = arith.constant dense<0.000000e+00> : vector<128x128xf32>
      %43 = tpu.matmul %42, %18, %cst_24 {dimension_numbers = #tpu.dot_dimension_numbers<[1], [0], [0], [1], [0, 0, 1, 1], [], []>} : vector<128x128xbf16>, vector<128x128xbf16>, vector<128x128xf32> -> vector<128x128xf32>
      %44 = arith.addf %41, %43 : vector<128x128xf32>
      %c0_25 = arith.constant 0 : index
      %c0_26 = arith.constant 0 : index
      %45 = vector.load %arg13[%c0_25, %c0_26] : memref<128x128xf32, #tpu.memory_space<vmem>>, vector<128x128xf32>
      tpu.vector_store %arg13[%c0_25, %c0_26], %44 {strides = array<i32>} : memref<128x128xf32, #tpu.memory_space<vmem>>, vector<128x128xf32>,
      %c0_27 = arith.constant 0 : index
      %c0_28 = arith.constant 0 : index
      %46 = vector.load %arg11[%c0_27, %c0_28] : memref<128x1xf32, #tpu.memory_space<vmem>>, vector<128x1xf32>
      tpu.vector_store %arg11[%c0_27, %c0_28], %27 {strides = array<i32>} : memref<128x1xf32, #tpu.memory_space<vmem>>, vector<128x1xf32>,
    } else {
    }
    %c0_i32_3 = arith.constant 0 : i32
    %8 = arith.cmpi eq, %arg2, %c0_i32_3 : i32
    %9 = arith.extui %8 : i1 to i32
    %c0_i32_4 = arith.constant 0 : i32
    %10 = arith.cmpi ne, %9, %c0_i32_4 : i32
    scf.if %10 {
      %c0 = arith.constant 0 : index
      %c0_5 = arith.constant 0 : index
      %11 = vector.load %arg12[%c0, %c0_5] : memref<128x1xf32, #tpu.memory_space<vmem>>, vector<128x1xf32>
      %12 = tpu.reciprocal %11 {approx = true} : vector<128x1xf32> -> vector<128x1xf32>
      %c0_6 = arith.constant 0 : index
      %c0_7 = arith.constant 0 : index
      %13 = vector.load %arg13[%c0_6, %c0_7] : memref<128x128xf32, #tpu.memory_space<vmem>>, vector<128x128xf32>
      %14 = vector.broadcast %12 : vector<128x1xf32> to vector<128x128xf32>
      %15 = arith.mulf %13, %14 : vector<128x128xf32>
      %c0_8 = arith.constant 0 : index
      %c0_9 = arith.constant 0 : index
      %c0_10 = arith.constant 0 : index
      %16 = vector.load %arg9[%c0_8, %c0_9, %c0_10] : memref<1x128x128xf32, #tpu.memory_space<vmem>>, vector<1x128x128xf32>
      %17 = vector.shape_cast %16 : vector<1x128x128xf32> to vector<128x128xf32>
      %18 = vector.shape_cast %15 : vector<128x128xf32> to vector<1x128x128xf32>
      tpu.vector_store %arg9[%c0_8, %c0_9, %c0_10], %18 {strides = array<i32>} : memref<1x128x128xf32, #tpu.memory_space<vmem>>, vector<1x128x128xf32>,
    } else {
    }
    return
  }
  func.func @transform_0(%arg0: i32, %arg1: i32, %arg2: i32, %arg3: memref<1xi32, #tpu.memory_space<smem>>) -> (i32, i32) {
    %c0_i32 = arith.constant 0 : i32
    %c0_i32_0 = arith.constant 0 : i32
    return %c0_i32, %arg2 : i32, i32
  }
  func.func @transform_1(%arg0: i32, %arg1: i32, %arg2: i32, %arg3: memref<1xi32, #tpu.memory_space<smem>>) -> (i32, i32, i32) {
    %c0_i32 = arith.constant 0 : i32
    %c0_i32_0 = arith.constant 0 : i32
    return %arg0, %arg1, %c0_i32 : i32, i32, i32
  }
  func.func @transform_2(%arg0: i32, %arg1: i32, %arg2: i32, %arg3: memref<1xi32, #tpu.memory_space<smem>>) -> (i32, i32, i32) {
    %c0_i32 = arith.constant 0 : i32
    %c0_i32_0 = arith.constant 0 : i32
    return %arg0, %arg2, %c0_i32 : i32, i32, i32
  }
  func.func @transform_3(%arg0: i32, %arg1: i32, %arg2: i32, %arg3: memref<1xi32, #tpu.memory_space<smem>>) -> (i32, i32) {
    %c0_i32 = arith.constant 0 : i32
    %c0_i32_0 = arith.constant 0 : i32
    %c0_i32_1 = arith.constant 0 : i32
    return %c0_i32, %c0_i32_0 : i32, i32
  }
  func.func @transform_4(%arg0: i32, %arg1: i32, %arg2: i32, %arg3: memref<1xi32, #tpu.memory_space<smem>>) -> (i32, i32) {
    %c0_i32 = arith.constant 0 : i32
    %c0_i32_0 = arith.constant 0 : i32
    %c0_i32_1 = arith.constant 0 : i32
    return %c0_i32, %c0_i32_0 : i32, i32
  }
  func.func @transform_5(%arg0: i32, %arg1: i32, %arg2: i32, %arg3: memref<1xi32, #tpu.memory_space<smem>>) -> (i32, i32, i32) {
    %c0_i32 = arith.constant 0 : i32
    %c0_i32_0 = arith.constant 0 : i32
    return %arg0, %arg1, %c0_i32 : i32, i32, i32
  }
}

</mosaic_0001>

<llo_original>
// kernel: tpu_custom_call.1
$region0: #{tpu_custom_call.1}
  #allocation0 [shape = 'u32[]', space=smem, size = 0x4, offset = 0x4, fixed_abs, tag = 'smem constant byte address 0x4 - core index']
  #allocation1 [shape = 'u32[72,128]{1,0:T(1,128)}', space=vmem, size = 0x9000, scoped, tag = 'internal scratch']
  #allocation2 [shape = 'bf16[128,128]{1,0:T(8,128)(2,1)}', space=vmem, size = 0x8000, scoped, tag = 'scratch operand']
  #allocation3 [shape = 'f32[128,1]{1,0:T(8,128)}', space=vmem, size = 0x10000, scoped, tag = 'scratch operand']
  #allocation4 [shape = 'f32[128,1]{1,0:T(8,128)}', space=vmem, size = 0x10000, scoped, tag = 'scratch operand']
  #allocation5 [shape = 'f32[128,128]{1,0:T(8,128)}', space=vmem, size = 0x10000, scoped, tag = 'scratch operand']
  #allocation6 [shape = 's32[1]{0}', space=sflag, size = 0x4, scoped, tag = 'scoped memory for tpu_custom_call.1']
  #allocation7 [shape = 's32[1]{0:T(128)S(6)}', space=smem, size = 0x200, scoped, tag = 'prefetched SMEM operand 0']
  %s0 = inlined_call_operand.<no memory space> [shape: s32[1], index: 0, kind: input, shape index: {}]
  %s1 = inlined_call_operand.vmem [shape: f32[1,128], index: 1, kind: input, shape index: {}]
  %s2 = inlined_call_operand.vmem [shape: f32[2,128,32], index: 2, kind: input, shape index: {}]
  %s3 = inlined_call_operand.vmem [shape: f32[2,128,32], index: 3, kind: input, shape index: {}]
  %s4 = inlined_call_operand.vmem [shape: f32[32,128], index: 4, kind: input, shape index: {}]
  %s5 = inlined_call_operand.vmem [shape: f32[32,256], index: 5, kind: input, shape index: {}]
  %s6 = inlined_call_operand.hbm [shape: f32[2,128,128], index: 6, kind: output, shape index: {}]
  %s7 = sld [smem:[#allocation0]]
  $region65: #{tpu_custom_call.1} parent=0
    _
  %s9 = ssub.s32 1, %s7
  %s10 = scalar_select 0, %s9, %s7
  %11 = sst [smem:[#allocation7]] %s0
  $region1: #{tpu_custom_call.1} parent=0
    #allocation8 [shape = 'u8[131072]{0}', space=vmem, size = 0x20000, scoped, tag = 'output window, operand 0']
    #allocation9 [shape = 's32[2]{0}', space=sflag, size = 0x8, scoped, tag = 'scoped memory for tpu_custom_call.1']
    %12 = vsyncpa [#allocation9], 0
    %s13 = scalar_lea.sflag [#allocation9], 1
    %14 = vsyncpa %s13, 0
    loop: start=0, step=1, limit=4
    $region2: #{tpu_custom_call.1} parent=1 // loop_pre_header
      _
    $region3: #{tpu_custom_call.1} parent=1 // loop_header
      %s16 = sphi 0, %s20
      %p17 = scmp.ge.s32.totalorder %s16, 4
      %s23 = sphi 0, %s42
      %s24 = sphi 0, %s38
      %s25 = sphi 0, %s34
      %s26 = sphi 0, %s23
      %s27 = sphi 0, %s24
      %s28 = sphi 0, %s25
      %s29 = sphi 0, %s26
      %s30 = sphi 0, %s27
      %s31 = sphi 0, %s28
      %s45 = sphi 0, %s47
      %s48 = sphi 0, %s45
      %s49 = sphi 0, %s48
      %s65 = sphi 0, %s49
      %s73 = sphi 0, %s75
      %s76 = sphi 0, %s73
      %s77 = sphi 0, %s76
      %s93 = sphi 0, %s77
      %s101 = sphi 0, %s103
      %s104 = sphi 0, %s101
      %s105 = sphi 0, %s104
      %s121 = sphi 0, %s105
      %s125 = sphi 0, %s125
      %s127 = sphi 0, %s125
      %s128 = sphi 0, %s127
      %s142 = sphi 0, %s128
      %s146 = sphi 0, %s146
      %s148 = sphi 0, %s146
      %s149 = sphi 0, %s148
      %s163 = sphi 0, %s149
      %s171 = sphi 0, %s173
      %s174 = sphi 0, %s171
      %s175 = sphi 0, %s174
      %s191 = sphi 0, %s175
    $region4: #{tpu_custom_call.1} parent=1 // loop_header_branch
      %19 = sbr.rel (%p17) target = $region8
    $region5: #{tpu_custom_call.1} parent=1 // loop_body
      %s21 = ssub.s32 %s16, 1
      %s22 = ssub.s32 %s16, 2
      %s32 = sadd.s32 1, %s25
      %p33 = scmp.ge.s32.totalorder %s32, 1
      %s34 = scalar_select %p33, 0, %s32
      %s35 = sadd.s32 1, %s24
      %s36 = scalar_select %p33, %s35, %s24
      %p37 = scmp.ge.s32.totalorder %s36, 1
      %s38 = scalar_select %p37, 0, %s36
      %s39 = sadd.s32 1, %s23
      %s40 = scalar_select %p37, %s39, %s23
      %p41 = scmp.ge.s32.totalorder %s40, 2
      %s42 = scalar_select %p41, 0, %s40
      %s43 = ssub.s32 %s25, %s34
      %p44 = scmp.eq.s32.totalorder %s43, 0
      %s46 = sadd.s32 %s45, 1
      %s47 = scalar_select %p44, %s45, %s46
      %p50 = pneg %p44
      %p51 = scmp.eq.s32.totalorder %s16, 1
      %p52 = por %p50, %p51
      %p53 = scmp.ne.s32.totalorder %s45, %s48
      %p54 = scmp.eq.s32.totalorder %s16, 0
      %p55 = por %p53, %p54
      %p56 = scmp.ne.s32.totalorder %s45, %s48
      %p57 = scmp.eq.s32.totalorder %s21, 1
      %p58 = por %p56, %p57
      %p59 = scmp.ne.s32.totalorder %s48, %s49
      %p60 = scmp.eq.s32.totalorder %s21, 0
      %p61 = por %p59, %p60
      %p62 = scmp.ne.s32.totalorder %s48, %s49
      %p63 = scmp.eq.s32.totalorder %s22, 1
      %p64 = por %p62, %p63
      %p66 = scmp.ne.s32.totalorder %s49, %s65
      %p67 = scmp.eq.s32.totalorder %s22, 0
      %p68 = por %p66, %p67
      %s69 = ssub.s32 %s23, %s42
      %s70 = ssub.s32 %s24, %s38
      %s71 = sor.u32 %s69, %s70
      %p72 = scmp.eq.s32.totalorder %s71, 0
      %s74 = sadd.s32 %s73, 1
      %s75 = scalar_select %p72, %s73, %s74
      %p78 = pneg %p72
      %p79 = scmp.eq.s32.totalorder %s16, 1
      %p80 = por %p78, %p79
      %p81 = scmp.ne.s32.totalorder %s73, %s76
      %p82 = scmp.eq.s32.totalorder %s16, 0
      %p83 = por %p81, %p82
      %p84 = scmp.ne.s32.totalorder %s73, %s76
      %p85 = scmp.eq.s32.totalorder %s21, 1
      %p86 = por %p84, %p85
      %p87 = scmp.ne.s32.totalorder %s76, %s77
      %p88 = scmp.eq.s32.totalorder %s21, 0
      %p89 = por %p87, %p88
      %p90 = scmp.ne.s32.totalorder %s76, %s77
      %p91 = scmp.eq.s32.totalorder %s22, 1
      %p92 = por %p90, %p91
      %p94 = scmp.ne.s32.totalorder %s77, %s93
      %p95 = scmp.eq.s32.totalorder %s22, 0
      %p96 = por %p94, %p95
      %s97 = ssub.s32 %s23, %s42
      %s98 = ssub.s32 %s25, %s34
      %s99 = sor.u32 %s97, %s98
      %p100 = scmp.eq.s32.totalorder %s99, 0
      %s102 = sadd.s32 %s101, 1
      %s103 = scalar_select %p100, %s101, %s102
      %p106 = pneg %p100
      %p107 = scmp.eq.s32.totalorder %s16, 1
      %p108 = por %p106, %p107
      %p109 = scmp.ne.s32.totalorder %s101, %s104
      %p110 = scmp.eq.s32.totalorder %s16, 0
      %p111 = por %p109, %p110
      %p112 = scmp.ne.s32.totalorder %s101, %s104
      %p113 = scmp.eq.s32.totalorder %s21, 1
      %p114 = por %p112, %p113
      %p115 = scmp.ne.s32.totalorder %s104, %s105
      %p116 = scmp.eq.s32.totalorder %s21, 0
      %p117 = por %p115, %p116
      %p118 = scmp.ne.s32.totalorder %s104, %s105
      %p119 = scmp.eq.s32.totalorder %s22, 1
      %p120 = por %p118, %p119
      %p122 = scmp.ne.s32.totalorder %s105, %s121
      %p123 = scmp.eq.s32.totalorder %s22, 0
      %p124 = por %p122, %p123
      %s126 = sadd.s32 %s125, 1
      %p129 = scmp.eq.s32.totalorder %s16, 1
      %p130 = scmp.ne.s32.totalorder %s125, %s127
      %p131 = scmp.eq.s32.totalorder %s16, 0
      %p132 = por %p130, %p131
      %p133 = scmp.ne.s32.totalorder %s125, %s127
      %p134 = scmp.eq.s32.totalorder %s21, 1
      %p135 = por %p133, %p134
      %p136 = scmp.ne.s32.totalorder %s127, %s128
      %p137 = scmp.eq.s32.totalorder %s21, 0
      %p138 = por %p136, %p137
      %p139 = scmp.ne.s32.totalorder %s127, %s128
      %p140 = scmp.eq.s32.totalorder %s22, 1
      %p141 = por %p139, %p140
      %p143 = scmp.ne.s32.totalorder %s128, %s142
      %p144 = scmp.eq.s32.totalorder %s22, 0
      %p145 = por %p143, %p144
      %s147 = sadd.s32 %s146, 1
      %p150 = scmp.eq.s32.totalorder %s16, 1
      %p151 = scmp.ne.s32.totalorder %s146, %s148
      %p152 = scmp.eq.s32.totalorder %s16, 0
      %p153 = por %p151, %p152
      %p154 = scmp.ne.s32.totalorder %s146, %s148
      %p155 = scmp.eq.s32.totalorder %s21, 1
      %p156 = por %p154, %p155
      %p157 = scmp.ne.s32.totalorder %s148, %s149
      %p158 = scmp.eq.s32.totalorder %s21, 0
      %p159 = por %p157, %p158
      %p160 = scmp.ne.s32.totalorder %s148, %s149
      %p161 = scmp.eq.s32.totalorder %s22, 1
      %p162 = por %p160, %p161
      %p164 = scmp.ne.s32.totalorder %s149, %s163
      %p165 = scmp.eq.s32.totalorder %s22, 0
      %p166 = por %p164, %p165
      %s167 = ssub.s32 %s23, %s42
      %s168 = ssub.s32 %s24, %s38
      %s169 = sor.u32 %s167, %s168
      %p170 = scmp.eq.s32.totalorder %s169, 0
      %s172 = sadd.s32 %s171, 1
      %s173 = scalar_select %p170, %s171, %s172
      %p176 = pneg %p170
      %p177 = scmp.eq.s32.totalorder %s16, 1
      %p178 = por %p176, %p177
      %p179 = scmp.ne.s32.totalorder %s171, %s174
      %p180 = scmp.eq.s32.totalorder %s16, 0
      %p181 = por %p179, %p180
      %p182 = scmp.ne.s32.totalorder %s171, %s174
      %p183 = scmp.eq.s32.totalorder %s21, 1
      %p184 = por %p182, %p183
      %p185 = scmp.ne.s32.totalorder %s174, %s175
      %p186 = scmp.eq.s32.totalorder %s21, 0
      %p187 = por %p185, %p186
      %p188 = scmp.ne.s32.totalorder %s174, %s175
      %p189 = scmp.eq.s32.totalorder %s22, 1
      %p190 = por %p188, %p189
      %p192 = scmp.ne.s32.totalorder %s175, %s191
      %p193 = scmp.eq.s32.totalorder %s22, 0
      %p194 = por %p192, %p193
      %p195 = scmp.le.s32.totalorder 1, %s16
      %p196 = scmp.lt.s32.totalorder %s16, 3
      %p197 = pnand %p195, %p196
      %p198 = pneg %p197
      // Predicated region
      $region9: #{tpu_custom_call.1} parent=5 // pred_check
        _
      $region10: #{tpu_custom_call.1} parent=5 // pred_check_branch
        %200 = sbr.rel (%p197) target = $region12
      $region11: #{tpu_custom_call.1} parent=5 // pred_region
        %s201 = ssub.s32 %s16, 1
        // Predicated region
        $region13: #{tpu_custom_call.1} parent=11 // pred_check
          %p202 = pneg %p61
        $region14: #{tpu_custom_call.1} parent=11 // pred_check_branch
          %204 = sbr.rel (%p202) target = $region16
        $region15: #{tpu_custom_call.1} parent=11 // pred_region
          %p205 = scmp.lt.s32.totalorder %s28, 0
          %s206 = scalar_select %p205, %s28, 0
          %s207 = scalar_lea.vmem %s1, %s206
        $region16: #{tpu_custom_call.1} parent=11 // pred_fallthru
          _
        // Predicated region
        $region17: #{tpu_custom_call.1} parent=11 // pred_check
          %p208 = pneg %p138
        $region18: #{tpu_custom_call.1} parent=11 // pred_check_branch
          %210 = sbr.rel (%p208) target = $region20
        $region19: #{tpu_custom_call.1} parent=11 // pred_region
          _
        $region20: #{tpu_custom_call.1} parent=11 // pred_fallthru
          _
        // Predicated region
        $region21: #{tpu_custom_call.1} parent=11 // pred_check
          %p211 = pneg %p159
        $region22: #{tpu_custom_call.1} parent=11 // pred_check_branch
          %213 = sbr.rel (%p211) target = $region24
        $region23: #{tpu_custom_call.1} parent=11 // pred_region
          _
        $region24: #{tpu_custom_call.1} parent=11 // pred_fallthru
          _
      $region12: #{tpu_custom_call.1} parent=5 // pred_fallthru
        _
      %p214 = scmp.lt.s32.totalorder %s16, 2
      // Predicated region
      $region25: #{tpu_custom_call.1} parent=5 // pred_check
        %p215 = pneg %p214
      $region26: #{tpu_custom_call.1} parent=5 // pred_check_branch
        %217 = sbr.rel (%p215) target = $region28
      $region27: #{tpu_custom_call.1} parent=5 // pred_region
        // Predicated region
        $region29: #{tpu_custom_call.1} parent=27 // pred_check
          %p218 = pneg %p83
        $region30: #{tpu_custom_call.1} parent=27 // pred_check_branch
          %220 = sbr.rel (%p218) target = $region32
        $region31: #{tpu_custom_call.1} parent=27 // pred_region
          %s221 = smul.u32 16, %s24
          %p222 = scmp.lt.s32.totalorder %s23, 1
          %s223 = scalar_select %p222, %s23, 1
          %p224 = scmp.lt.s32.totalorder %s221, 15
          %s225 = scalar_select %p224, %s221, 15
          %s226 = smul.addr %s223, 16
          %s227 = sadd.s32 %s225, %s226
          %s228 = smul.addr %s227, 8
          %s229 = scalar_lea.vmem %s2, %s228
          %s230 = smul.u32 16, %s24
        $region32: #{tpu_custom_call.1} parent=27 // pred_fallthru
          _
        // Predicated region
        $region33: #{tpu_custom_call.1} parent=27 // pred_check
          %p231 = pneg %p111
        $region34: #{tpu_custom_call.1} parent=27 // pred_check_branch
          %233 = sbr.rel (%p231) target = $region36
        $region35: #{tpu_custom_call.1} parent=27 // pred_region
          %s234 = smul.u32 16, %s25
          %p235 = scmp.lt.s32.totalorder %s23, 1
          %s236 = scalar_select %p235, %s23, 1
          %p237 = scmp.lt.s32.totalorder %s234, 15
          %s238 = scalar_select %p237, %s234, 15
          %s239 = smul.addr %s236, 16
          %s240 = sadd.s32 %s238, %s239
          %s241 = smul.addr %s240, 8
          %s242 = scalar_lea.vmem %s3, %s241
          %s243 = smul.u32 16, %s25
        $region36: #{tpu_custom_call.1} parent=27 // pred_fallthru
          _
      $region28: #{tpu_custom_call.1} parent=5 // pred_fallthru
        _
      %p244 = scmp.le.s32.totalorder 1, %s16
      %p245 = scmp.lt.s32.totalorder %s16, 3
      %p246 = pnand %p244, %p245
      %p247 = pneg %p246
      // Predicated region
      $region37: #{tpu_custom_call.1} parent=5 // pred_check
        _
      $region38: #{tpu_custom_call.1} parent=5 // pred_check_branch
        %249 = sbr.rel (%p246) target = $region40
      $region39: #{tpu_custom_call.1} parent=5 // pred_region
        %s250 = ssub.s32 %s16, 1
        %p251 = scmp.lt.s32.totalorder %s28, 0
        %s252 = scalar_select %p251, %s28, 0
        %s253 = scalar_lea.vmem %s1, %s252
        %p254 = pneg %p61
        %p255 = pneg %p58
        %s256 = smul.u32 16, %s27
        %p257 = scmp.lt.s32.totalorder %s26, 1
        %s258 = scalar_select %p257, %s26, 1
        %p259 = scmp.lt.s32.totalorder %s256, 15
        %s260 = scalar_select %p259, %s256, 15
        %s261 = smul.addr %s258, 16
        %s262 = sadd.s32 %s260, %s261
        %s263 = smul.addr %s262, 8
        %s264 = scalar_lea.vmem %s2, %s263
        %p265 = pneg %p89
        %p266 = pneg %p86
        %s267 = smul.u32 16, %s28
        %p268 = scmp.lt.s32.totalorder %s26, 1
        %s269 = scalar_select %p268, %s26, 1
        %p270 = scmp.lt.s32.totalorder %s267, 15
        %s271 = scalar_select %p270, %s267, 15
        %s272 = smul.addr %s269, 16
        %s273 = sadd.s32 %s271, %s272
        %s274 = smul.addr %s273, 8
        %s275 = scalar_lea.vmem %s3, %s274
        %p276 = pneg %p117
        %p277 = pneg %p114
        %p278 = pneg %p138
        %p279 = pneg %p135
        %p280 = pneg %p159
        %p281 = pneg %p156
        %p282 = pneg %p187
        %p283 = pneg %p184
        %s284 = sand.u32 %s174, 1
        %s285 = scalar_lea.sflag [#allocation9], %s284
        %s286 = sand.u32 %s174, 1
        %s287 = smul.addr %s286, 128
        %s288 = scalar_lea.vmem [#allocation8], %s287
        %p289 = scmp.lt.s32.totalorder %s28, 0
        %s290 = scalar_select %p289, %s28, 0
        %s291 = scalar_lea.vmem %s1, %s290
        %s292 = smul.u32 16, %s27
        %p293 = scmp.lt.s32.totalorder %s26, 1
        %s294 = scalar_select %p293, %s26, 1
        %p295 = scmp.lt.s32.totalorder %s292, 15
        %s296 = scalar_select %p295, %s292, 15
        %s297 = smul.addr %s294, 16
        %s298 = sadd.s32 %s296, %s297
        %s299 = smul.addr %s298, 8
        %s300 = scalar_lea.vmem %s2, %s299
        %s301 = smul.u32 16, %s27
        %s302 = smul.u32 16, %s28
        %p303 = scmp.lt.s32.totalorder %s26, 1
        %s304 = scalar_select %p303, %s26, 1
        %p305 = scmp.lt.s32.totalorder %s302, 15
        %s306 = scalar_select %p305, %s302, 15
        %s307 = smul.addr %s304, 16
        %s308 = sadd.s32 %s306, %s307
        %s309 = smul.addr %s308, 8
        %s310 = scalar_lea.vmem %s3, %s309
        %s311 = smul.u32 16, %s28
        %s312 = smul.u32 16, %s27
        %s313 = sld [smem:[#allocation7 + %s28]]
        %p314 = scmp.ne.s32.totalorder %s313, 0
        %p315 = scmp.eq.s32.totalorder %s28, 0
        // Predicated region
        $region41: #{tpu_custom_call.1} parent=39 // pred_check
          %p316 = pneg %p315
        $region42: #{tpu_custom_call.1} parent=39 // pred_check_branch
          %318 = sbr.rel (%p316) target = $region44
        $region43: #{tpu_custom_call.1} parent=39 // pred_region
          %vm319 = vcmask 7168
          %320 = vst.msk [vmem:[#allocation3] sm:$0xff] %vm319, -inf
          %321 = vst.msk [vmem:[#allocation3 + $0x8] sm:$0xff] %vm319, -inf
          %322 = vst.msk [vmem:[#allocation3 + $0x10] sm:$0xff] %vm319, -inf
          %323 = vst.msk [vmem:[#allocation3 + $0x18] sm:$0xff] %vm319, -inf
          %324 = vst.msk [vmem:[#allocation3 + $0x20] sm:$0xff] %vm319, -inf
          %325 = vst.msk [vmem:[#allocation3 + $0x28] sm:$0xff] %vm319, -inf
          %326 = vst.msk [vmem:[#allocation3 + $0x30] sm:$0xff] %vm319, -inf
          %327 = vst.msk [vmem:[#allocation3 + $0x38] sm:$0xff] %vm319, -inf
          %328 = vst.msk [vmem:[#allocation3 + $0x40] sm:$0xff] %vm319, -inf
          %329 = vst.msk [vmem:[#allocation3 + $0x48] sm:$0xff] %vm319, -inf
          %330 = vst.msk [vmem:[#allocation3 + $0x50] sm:$0xff] %vm319, -inf
          %331 = vst.msk [vmem:[#allocation3 + $0x58] sm:$0xff] %vm319, -inf
          %332 = vst.msk [vmem:[#allocation3 + $0x60] sm:$0xff] %vm319, -inf
          %333 = vst.msk [vmem:[#allocation3 + $0x68] sm:$0xff] %vm319, -inf
          %334 = vst.msk [vmem:[#allocation3 + $0x70] sm:$0xff] %vm319, -inf
          %335 = vst.msk [vmem:[#allocation3 + $0x78] sm:$0xff] %vm319, -inf
          %336 = vst.msk [vmem:[#allocation4] sm:$0xff] %vm319, 0.0
          %337 = vst.msk [vmem:[#allocation4 + $0x8] sm:$0xff] %vm319, 0.0
          %338 = vst.msk [vmem:[#allocation4 + $0x10] sm:$0xff] %vm319, 0.0
          %339 = vst.msk [vmem:[#allocation4 + $0x18] sm:$0xff] %vm319, 0.0
          %340 = vst.msk [vmem:[#allocation4 + $0x20] sm:$0xff] %vm319, 0.0
          %341 = vst.msk [vmem:[#allocation4 + $0x28] sm:$0xff] %vm319, 0.0
          %342 = vst.msk [vmem:[#allocation4 + $0x30] sm:$0xff] %vm319, 0.0
          %343 = vst.msk [vmem:[#allocation4 + $0x38] sm:$0xff] %vm319, 0.0
          %344 = vst.msk [vmem:[#allocation4 + $0x40] sm:$0xff] %vm319, 0.0
          %345 = vst.msk [vmem:[#allocation4 + $0x48] sm:$0xff] %vm319, 0.0
          %346 = vst.msk [vmem:[#allocation4 + $0x50] sm:$0xff] %vm319, 0.0
          %347 = vst.msk [vmem:[#allocation4 + $0x58] sm:$0xff] %vm319, 0.0
          %348 = vst.msk [vmem:[#allocation4 + $0x60] sm:$0xff] %vm319, 0.0
          %349 = vst.msk [vmem:[#allocation4 + $0x68] sm:$0xff] %vm319, 0.0
          %350 = vst.msk [vmem:[#allocation4 + $0x70] sm:$0xff] %vm319, 0.0
          %351 = vst.msk [vmem:[#allocation4 + $0x78] sm:$0xff] %vm319, 0.0
          %352 = vst [vmem:[#allocation5] sm:$0xff] 0.0
          %353 = vst [vmem:[#allocation5 + $0x8] sm:$0xff] 0.0
          %354 = vst [vmem:[#allocation5 + $0x10] sm:$0xff] 0.0
          %355 = vst [vmem:[#allocation5 + $0x18] sm:$0xff] 0.0
          %356 = vst [vmem:[#allocation5 + $0x20] sm:$0xff] 0.0
          %357 = vst [vmem:[#allocation5 + $0x28] sm:$0xff] 0.0
          %358 = vst [vmem:[#allocation5 + $0x30] sm:$0xff] 0.0
          %359 = vst [vmem:[#allocation5 + $0x38] sm:$0xff] 0.0
          %360 = vst [vmem:[#allocation5 + $0x40] sm:$0xff] 0.0
          %361 = vst [vmem:[#allocation5 + $0x48] sm:$0xff] 0.0
          %362 = vst [vmem:[#allocation5 + $0x50] sm:$0xff] 0.0
          %363 = vst [vmem:[#allocation5 + $0x58] sm:$0xff] 0.0
          %364 = vst [vmem:[#allocation5 + $0x60] sm:$0xff] 0.0
          %365 = vst [vmem:[#allocation5 + $0x68] sm:$0xff] 0.0
          %366 = vst [vmem:[#allocation5 + $0x70] sm:$0xff] 0.0
          %367 = vst [vmem:[#allocation5 + $0x78] sm:$0xff] 0.0
          %v368 = vld [vmem:[%s300] sm:$0xff]
          %v369 = vld [vmem:[%s300 + $0x8] sm:$0xff]
          %v370 = vld [vmem:[%s300 + $0x10] sm:$0xff]
          %v371 = vld [vmem:[%s300 + $0x18] sm:$0xff]
          %v372 = vld [vmem:[%s300 + $0x20] sm:$0xff]
          %v373 = vld [vmem:[%s300 + $0x28] sm:$0xff]
          %v374 = vld [vmem:[%s300 + $0x30] sm:$0xff]
          %v375 = vld [vmem:[%s300 + $0x38] sm:$0xff]
          %v376 = vld [vmem:[%s300 + $0x40] sm:$0xff]
          %v377 = vld [vmem:[%s300 + $0x48] sm:$0xff]
          %v378 = vld [vmem:[%s300 + $0x50] sm:$0xff]
          %v379 = vld [vmem:[%s300 + $0x58] sm:$0xff]
          %v380 = vld [vmem:[%s300 + $0x60] sm:$0xff]
          %v381 = vld [vmem:[%s300 + $0x68] sm:$0xff]
          %v382 = vld [vmem:[%s300 + $0x70] sm:$0xff]
          %v383 = vld [vmem:[%s300 + $0x78] sm:$0xff]
          %v384 = vld [vmem:[%s4] sm:$0xff]
          %v385 = vld [vmem:[%s4 + $0x8] sm:$0xff]
          %v386 = vld [vmem:[%s4 + $0x10] sm:$0xff]
          %v387 = vld [vmem:[%s4 + $0x18] sm:$0xff]
          %vm388 = vcmask 261120
          %v390 = vsel %vm388, %v368, 0
          %v393 = vsel %vm388, %v369, 0
          %v396 = vsel %vm388, %v370, 0
          %v399 = vsel %vm388, %v371, 0
          %v402 = vsel %vm388, %v372, 0
          %v405 = vsel %vm388, %v373, 0
          %v408 = vsel %vm388, %v374, 0
          %v411 = vsel %vm388, %v375, 0
          %v414 = vsel %vm388, %v376, 0
          %v417 = vsel %vm388, %v377, 0
          %v420 = vsel %vm388, %v378, 0
          %v423 = vsel %vm388, %v379, 0
          %v426 = vsel %vm388, %v380, 0
          %v429 = vsel %vm388, %v381, 0
          %v432 = vsel %vm388, %v382, 0
          %v435 = vsel %vm388, %v383, 0
          %437 = vmatpush.msra.mxu0 0.0
          %438 = vmatpush.msra.mxu0 0.0
          %439 = vmatpush.msra.mxu0 0.0
          %440 = vmatpush.msra.mxu0 0.0
          %441 = vmatpush.msra.mxu0 0.0
          %442 = vmatpush.msra.mxu0 0.0
          %443 = vmatpush.msra.mxu0 0.0
          %444 = vmatpush.msra.mxu0 0.0
          %445 = vmatpush.msra.mxu0 0.0
          %446 = vmatpush.msra.mxu0 0.0
          %447 = vmatpush.msra.mxu0 0.0
          %448 = vmatpush.msra.mxu0 0.0
          %449 = vmatpush.msra.mxu0 %v387
          %450 = vmatpush.msra.mxu0 %v386
          %451 = vmatpush.msra.mxu0 %v385
          %452 = vmatpush.msra.mxu0 %v384
          %453 = vmatmul.f32.gmra.mxu0 %v390
          %v454 = vpop.f32.mrf.mxu0
          %v455 = vadd.f32 0.0, %v454
          %456 = vmatmul.f32.gmra.mxu0 %v393
          %v457 = vpop.f32.mrf.mxu0
          %v458 = vadd.f32 0.0, %v457
          %459 = vmatmul.f32.gmra.mxu0 %v396
          %v460 = vpop.f32.mrf.mxu0
          %v461 = vadd.f32 0.0, %v460
          %462 = vmatmul.f32.gmra.mxu0 %v399
          %v463 = vpop.f32.mrf.mxu0
          %v464 = vadd.f32 0.0, %v463
          %465 = vmatmul.f32.gmra.mxu0 %v402
          %v466 = vpop.f32.mrf.mxu0
          %v467 = vadd.f32 0.0, %v466
          %468 = vmatmul.f32.gmra.mxu0 %v405
          %v469 = vpop.f32.mrf.mxu0
          %v470 = vadd.f32 0.0, %v469
          %471 = vmatmul.f32.gmra.mxu0 %v408
          %v472 = vpop.f32.mrf.mxu0
          %v473 = vadd.f32 0.0, %v472
          %474 = vmatmul.f32.gmra.mxu0 %v411
          %v475 = vpop.f32.mrf.mxu0
          %v476 = vadd.f32 0.0, %v475
          %477 = vmatmul.f32.gmra.mxu0 %v414
          %v478 = vpop.f32.mrf.mxu0
          %v479 = vadd.f32 0.0, %v478
          %480 = vmatmul.f32.gmra.mxu0 %v417
          %v481 = vpop.f32.mrf.mxu0
          %v482 = vadd.f32 0.0, %v481
          %483 = vmatmul.f32.gmra.mxu0 %v420
          %v484 = vpop.f32.mrf.mxu0
          %v485 = vadd.f32 0.0, %v484
          %486 = vmatmul.f32.gmra.mxu0 %v423
          %v487 = vpop.f32.mrf.mxu0
          %v488 = vadd.f32 0.0, %v487
          %489 = vmatmul.f32.gmra.mxu0 %v426
          %v490 = vpop.f32.mrf.mxu0
          %v491 = vadd.f32 0.0, %v490
          %492 = vmatmul.f32.gmra.mxu0 %v429
          %v493 = vpop.f32.mrf.mxu0
          %v494 = vadd.f32 0.0, %v493
          %495 = vmatmul.f32.gmra.mxu0 %v432
          %v496 = vpop.f32.mrf.mxu0
          %v497 = vadd.f32 0.0, %v496
          %498 = vmatmul.f32.gmra.mxu0 %v435
          %v499 = vpop.f32.mrf.mxu0
          %v500 = vadd.f32 0.0, %v499
          %501 = vdwg.mxu0
          %v502 = vpack.c.bf16 %v455, %v455
          %v503 = vpack.c.bf16 %v458, %v458
          %v504 = vpack.c.bf16 %v461, %v461
          %v505 = vpack.c.bf16 %v464, %v464
          %v506 = vpack.c.bf16 %v467, %v467
          %v507 = vpack.c.bf16 %v470, %v470
          %v508 = vpack.c.bf16 %v473, %v473
          %v509 = vpack.c.bf16 %v476, %v476
          %v510 = vpack.c.bf16 %v479, %v479
          %v511 = vpack.c.bf16 %v482, %v482
          %v512 = vpack.c.bf16 %v485, %v485
          %v513 = vpack.c.bf16 %v488, %v488
          %v514 = vpack.c.bf16 %v491, %v491
          %v515 = vpack.c.bf16 %v494, %v494
          %v516 = vpack.c.bf16 %v497, %v497
          %v517 = vpack.c.bf16 %v500, %v500
          %518 = vst [vmem:[#allocation2] sm:$0xf] %v502
          %519 = vst [vmem:[#allocation2 + $0x4] sm:$0xf] %v503
          %520 = vst [vmem:[#allocation2 + $0x8] sm:$0xf] %v504
          %521 = vst [vmem:[#allocation2 + $0xc] sm:$0xf] %v505
          %522 = vst [vmem:[#allocation2 + $0x10] sm:$0xf] %v506
          %523 = vst [vmem:[#allocation2 + $0x14] sm:$0xf] %v507
          %524 = vst [vmem:[#allocation2 + $0x18] sm:$0xf] %v508
          %525 = vst [vmem:[#allocation2 + $0x1c] sm:$0xf] %v509
          %526 = vst [vmem:[#allocation2 + $0x20] sm:$0xf] %v510
          %527 = vst [vmem:[#allocation2 + $0x24] sm:$0xf] %v511
          %528 = vst [vmem:[#allocation2 + $0x28] sm:$0xf] %v512
          %529 = vst [vmem:[#allocation2 + $0x2c] sm:$0xf] %v513
          %530 = vst [vmem:[#allocation2 + $0x30] sm:$0xf] %v514
          %531 = vst [vmem:[#allocation2 + $0x34] sm:$0xf] %v515
          %532 = vst [vmem:[#allocation2 + $0x38] sm:$0xf] %v516
          %533 = vst [vmem:[#allocation2 + $0x3c] sm:$0xf] %v517
        $region44: #{tpu_custom_call.1} parent=39 // pred_fallthru
          _
        // Predicated region
        $region45: #{tpu_custom_call.1} parent=39 // pred_check
          %p534 = pneg %p314
        $region46: #{tpu_custom_call.1} parent=39 // pred_check_branch
          %536 = sbr.rel (%p534) target = $region48
        $region47: #{tpu_custom_call.1} parent=39 // pred_region
          %v537 = vld [vmem:[%s310] sm:$0xff]
          %v538 = vld [vmem:[%s310 + $0x8] sm:$0xff]
          %v539 = vld [vmem:[%s310 + $0x10] sm:$0xff]
          %v540 = vld [vmem:[%s310 + $0x18] sm:$0xff]
          %v541 = vld [vmem:[%s310 + $0x20] sm:$0xff]
          %v542 = vld [vmem:[%s310 + $0x28] sm:$0xff]
          %v543 = vld [vmem:[%s310 + $0x30] sm:$0xff]
          %v544 = vld [vmem:[%s310 + $0x38] sm:$0xff]
          %v545 = vld [vmem:[%s310 + $0x40] sm:$0xff]
          %v546 = vld [vmem:[%s310 + $0x48] sm:$0xff]
          %v547 = vld [vmem:[%s310 + $0x50] sm:$0xff]
          %v548 = vld [vmem:[%s310 + $0x58] sm:$0xff]
          %v549 = vld [vmem:[%s310 + $0x60] sm:$0xff]
          %v550 = vld [vmem:[%s310 + $0x68] sm:$0xff]
          %v551 = vld [vmem:[%s310 + $0x70] sm:$0xff]
          %v552 = vld [vmem:[%s310 + $0x78] sm:$0xff]
          %v553 = vld [vmem:[%s5] sm:$0xff]
          %v554 = vld [vmem:[%s5 + $0x8] sm:$0xff]
          %v555 = vld [vmem:[%s5 + $0x10] sm:$0xff]
          %v556 = vld [vmem:[%s5 + $0x18] sm:$0xff]
          %v557 = vld [vmem:[%s5 + $0x20] sm:$0xff]
          %v558 = vld [vmem:[%s5 + $0x28] sm:$0xff]
          %v559 = vld [vmem:[%s5 + $0x30] sm:$0xff]
          %v560 = vld [vmem:[%s5 + $0x38] sm:$0xff]
          %vm561 = vcmask 261120
          %v563 = vsel %vm561, %v537, 0
          %v566 = vsel %vm561, %v538, 0
          %v569 = vsel %vm561, %v539, 0
          %v572 = vsel %vm561, %v540, 0
          %v575 = vsel %vm561, %v541, 0
          %v578 = vsel %vm561, %v542, 0
          %v581 = vsel %vm561, %v543, 0
          %v584 = vsel %vm561, %v544, 0
          %v587 = vsel %vm561, %v545, 0
          %v590 = vsel %vm561, %v546, 0
          %v593 = vsel %vm561, %v547, 0
          %v596 = vsel %vm561, %v548, 0
          %v599 = vsel %vm561, %v549, 0
          %v602 = vsel %vm561, %v550, 0
          %v605 = vsel %vm561, %v551, 0
          %v608 = vsel %vm561, %v552, 0
          %610 = vmatpush.msra.mxu0 0.0
          %611 = vmatpush.msra.mxu0 0.0
          %612 = vmatpush.msra.mxu0 0.0
          %613 = vmatpush.msra.mxu0 0.0
          %614 = vmatpush.msra.mxu0 0.0
          %615 = vmatpush.msra.mxu0 0.0
          %616 = vmatpush.msra.mxu0 0.0
          %617 = vmatpush.msra.mxu0 0.0
          %618 = vmatpush.msra.mxu0 0.0
          %619 = vmatpush.msra.mxu0 0.0
          %620 = vmatpush.msra.mxu0 0.0
          %621 = vmatpush.msra.mxu0 0.0
          %622 = vmatpush.msra.mxu0 %v559
          %623 = vmatpush.msra.mxu0 %v557
          %624 = vmatpush.msra.mxu0 %v555
          %625 = vmatpush.msra.mxu0 %v553
          %626 = vmatmul.f32.gmra.mxu0 %v563
          %v627 = vpop.f32.mrf.mxu0
          %v628 = vadd.f32 0.0, %v627
          %629 = vmatmul.f32.gmra.mxu0 %v566
          %v630 = vpop.f32.mrf.mxu0
          %v631 = vadd.f32 0.0, %v630
          %632 = vmatmul.f32.gmra.mxu0 %v569
          %v633 = vpop.f32.mrf.mxu0
          %v634 = vadd.f32 0.0, %v633
          %635 = vmatmul.f32.gmra.mxu0 %v572
          %v636 = vpop.f32.mrf.mxu0
          %v637 = vadd.f32 0.0, %v636
          %638 = vmatmul.f32.gmra.mxu0 %v575
          %v639 = vpop.f32.mrf.mxu0
          %v640 = vadd.f32 0.0, %v639
          %641 = vmatmul.f32.gmra.mxu0 %v578
          %v642 = vpop.f32.mrf.mxu0
          %v643 = vadd.f32 0.0, %v642
          %644 = vmatmul.f32.gmra.mxu0 %v581
          %v645 = vpop.f32.mrf.mxu0
          %v646 = vadd.f32 0.0, %v645
          %647 = vmatmul.f32.gmra.mxu0 %v584
          %v648 = vpop.f32.mrf.mxu0
          %v649 = vadd.f32 0.0, %v648
          %650 = vmatmul.f32.gmra.mxu0 %v587
          %v651 = vpop.f32.mrf.mxu0
          %v652 = vadd.f32 0.0, %v651
          %653 = vmatmul.f32.gmra.mxu0 %v590
          %v654 = vpop.f32.mrf.mxu0
          %v655 = vadd.f32 0.0, %v654
          %656 = vmatmul.f32.gmra.mxu0 %v593
          %v657 = vpop.f32.mrf.mxu0
          %v658 = vadd.f32 0.0, %v657
          %659 = vmatmul.f32.gmra.mxu0 %v596
          %v660 = vpop.f32.mrf.mxu0
          %v661 = vadd.f32 0.0, %v660
          %662 = vmatmul.f32.gmra.mxu0 %v599
          %v663 = vpop.f32.mrf.mxu0
          %v664 = vadd.f32 0.0, %v663
          %665 = vmatmul.f32.gmra.mxu0 %v602
          %v666 = vpop.f32.mrf.mxu0
          %v667 = vadd.f32 0.0, %v666
          %668 = vmatmul.f32.gmra.mxu0 %v605
          %v669 = vpop.f32.mrf.mxu0
          %v670 = vadd.f32 0.0, %v669
          %671 = vmatmul.f32.gmra.mxu0 %v608
          %v672 = vpop.f32.mrf.mxu0
          %v673 = vadd.f32 0.0, %v672
          %674 = vdwg.mxu0
          %675 = vmatpush.msra.mxu0 0.0
          %676 = vmatpush.msra.mxu0 0.0
          %677 = vmatpush.msra.mxu0 0.0
          %678 = vmatpush.msra.mxu0 0.0
          %679 = vmatpush.msra.mxu0 0.0
          %680 = vmatpush.msra.mxu0 0.0
          %681 = vmatpush.msra.mxu0 0.0
          %682 = vmatpush.msra.mxu0 0.0
          %683 = vmatpush.msra.mxu0 0.0
          %684 = vmatpush.msra.mxu0 0.0
          %685 = vmatpush.msra.mxu0 0.0
          %686 = vmatpush.msra.mxu0 0.0
          %687 = vmatpush.msra.mxu0 %v560
          %688 = vmatpush.msra.mxu0 %v558
          %689 = vmatpush.msra.mxu0 %v556
          %690 = vmatpush.msra.mxu0 %v554
          %691 = vmatmul.f32.gmra.mxu0 %v563
          %v692 = vpop.f32.mrf.mxu0
          %v693 = vadd.f32 0.0, %v692
          %694 = vmatmul.f32.gmra.mxu0 %v566
          %v695 = vpop.f32.mrf.mxu0
          %v696 = vadd.f32 0.0, %v695
          %697 = vmatmul.f32.gmra.mxu0 %v569
          %v698 = vpop.f32.mrf.mxu0
          %v699 = vadd.f32 0.0, %v698
          %700 = vmatmul.f32.gmra.mxu0 %v572
          %v701 = vpop.f32.mrf.mxu0
          %v702 = vadd.f32 0.0, %v701
          %703 = vmatmul.f32.gmra.mxu0 %v575
          %v704 = vpop.f32.mrf.mxu0
          %v705 = vadd.f32 0.0, %v704
          %706 = vmatmul.f32.gmra.mxu0 %v578
          %v707 = vpop.f32.mrf.mxu0
          %v708 = vadd.f32 0.0, %v707
          %709 = vmatmul.f32.gmra.mxu0 %v581
          %v710 = vpop.f32.mrf.mxu0
          %v711 = vadd.f32 0.0, %v710
          %712 = vmatmul.f32.gmra.mxu0 %v584
          %v713 = vpop.f32.mrf.mxu0
          %v714 = vadd.f32 0.0, %v713
          %715 = vmatmul.f32.gmra.mxu0 %v587
          %v716 = vpop.f32.mrf.mxu0
          %v717 = vadd.f32 0.0, %v716
          %718 = vmatmul.f32.gmra.mxu0 %v590
          %v719 = vpop.f32.mrf.mxu0
          %v720 = vadd.f32 0.0, %v719
          %721 = vmatmul.f32.gmra.mxu0 %v593
          %v722 = vpop.f32.mrf.mxu0
          %v723 = vadd.f32 0.0, %v722
          %724 = vmatmul.f32.gmra.mxu0 %v596
          %v725 = vpop.f32.mrf.mxu0
          %v726 = vadd.f32 0.0, %v725
          %727 = vmatmul.f32.gmra.mxu0 %v599
          %v728 = vpop.f32.mrf.mxu0
          %v729 = vadd.f32 0.0, %v728
          %730 = vmatmul.f32.gmra.mxu0 %v602
          %v731 = vpop.f32.mrf.mxu0
          %v732 = vadd.f32 0.0, %v731
          %733 = vmatmul.f32.gmra.mxu0 %v605
          %v734 = vpop.f32.mrf.mxu0
          %v735 = vadd.f32 0.0, %v734
          %736 = vmatmul.f32.gmra.mxu0 %v608
          %v737 = vpop.f32.mrf.mxu0
          %v738 = vadd.f32 0.0, %v737
          %739 = vdwg.mxu0
          %v740 = vpack.c.bf16 %v631, %v628
          %v741 = vpack.c.bf16 %v637, %v634
          %v742 = vpack.c.bf16 %v643, %v640
          %v743 = vpack.c.bf16 %v649, %v646
          %v744 = vpack.c.bf16 %v655, %v652
          %v745 = vpack.c.bf16 %v661, %v658
          %v746 = vpack.c.bf16 %v667, %v664
          %v747 = vpack.c.bf16 %v673, %v670
          %v748 = vpack.c.bf16 %v696, %v693
          %v749 = vpack.c.bf16 %v702, %v699
          %v750 = vpack.c.bf16 %v708, %v705
          %v751 = vpack.c.bf16 %v714, %v711
          %v752 = vpack.c.bf16 %v720, %v717
          %v753 = vpack.c.bf16 %v726, %v723
          %v754 = vpack.c.bf16 %v732, %v729
          %v755 = vpack.c.bf16 %v738, %v735
          %v756 = vld [vmem:[#allocation2] sm:$0xf]
          %v757 = vld [vmem:[#allocation2 + $0x4] sm:$0xf]
          %v758 = vld [vmem:[#allocation2 + $0x8] sm:$0xf]
          %v759 = vld [vmem:[#allocation2 + $0xc] sm:$0xf]
          %v760 = vld [vmem:[#allocation2 + $0x10] sm:$0xf]
          %v761 = vld [vmem:[#allocation2 + $0x14] sm:$0xf]
          %v762 = vld [vmem:[#allocation2 + $0x18] sm:$0xf]
          %v763 = vld [vmem:[#allocation2 + $0x1c] sm:$0xf]
          %v764 = vld [vmem:[#allocation2 + $0x20] sm:$0xf]
          %v765 = vld [vmem:[#allocation2 + $0x24] sm:$0xf]
          %v766 = vld [vmem:[#allocation2 + $0x28] sm:$0xf]
          %v767 = vld [vmem:[#allocation2 + $0x2c] sm:$0xf]
          %v768 = vld [vmem:[#allocation2 + $0x30] sm:$0xf]
          %v769 = vld [vmem:[#allocation2 + $0x34] sm:$0xf]
          %v770 = vld [vmem:[#allocation2 + $0x38] sm:$0xf]
          %v771 = vld [vmem:[#allocation2 + $0x3c] sm:$0xf]
          %v772 = vld [vmem:[%s291] sm:$0x1]
          %v774 = vperm.slane %v772, 0
          %v792 = vunpack.c.l.b16 %v756
          %v793 = vunpack.c.l.b16 %v757
          %v794 = vunpack.c.l.b16 %v758
          %v795 = vunpack.c.l.b16 %v759
          %v796 = vunpack.c.l.b16 %v760
          %v797 = vunpack.c.l.b16 %v761
          %v798 = vunpack.c.l.b16 %v762
          %v799 = vunpack.c.l.b16 %v763
          %v800 = vunpack.c.l.b16 %v764
          %v801 = vunpack.c.l.b16 %v765
          %v802 = vunpack.c.l.b16 %v766
          %v803 = vunpack.c.l.b16 %v767
          %v804 = vunpack.c.l.b16 %v768
          %v805 = vunpack.c.l.b16 %v769
          %v806 = vunpack.c.l.b16 %v770
          %v807 = vunpack.c.l.b16 %v771
          %v808 = vpack.c.b16 %v793, %v792
          %v809 = vpack.c.b16 %v795, %v794
          %v810 = vpack.c.b16 %v797, %v796
          %v811 = vpack.c.b16 %v799, %v798
          %v812 = vpack.c.b16 %v801, %v800
          %v813 = vpack.c.b16 %v803, %v802
          %v814 = vpack.c.b16 %v805, %v804
          %v815 = vpack.c.b16 %v807, %v806
          %824 = vmatpush.bf16.xpose.msra.mxu0 %v747
          %825 = vmatpush.bf16.xpose.msra.mxu0 %v746
          %826 = vmatpush.bf16.xpose.msra.mxu0 %v745
          %827 = vmatpush.bf16.xpose.msra.mxu0 %v744
          %828 = vmatpush.bf16.xpose.msra.mxu0 %v743
          %829 = vmatpush.bf16.xpose.msra.mxu0 %v742
          %830 = vmatpush.bf16.xpose.msra.mxu0 %v741
          %831 = vmatpush.bf16.xpose.msra.mxu0 %v740
          %832 = vmatmul.bf16.gmra.mxu0 %v808
          %v833 = vpop.f32.mrf.mxu0
          %v834 = vadd.f32 %v774, %v833
          %v835 = vpop.f32.mrf.mxu0
          %v836 = vadd.f32 %v774, %v835
          %837 = vmatmul.bf16.gmra.mxu0 %v809
          %v838 = vpop.f32.mrf.mxu0
          %v839 = vadd.f32 %v774, %v838
          %v840 = vpop.f32.mrf.mxu0
          %v841 = vadd.f32 %v774, %v840
          %842 = vmatmul.bf16.gmra.mxu0 %v810
          %v843 = vpop.f32.mrf.mxu0
          %v844 = vadd.f32 %v774, %v843
          %v845 = vpop.f32.mrf.mxu0
          %v846 = vadd.f32 %v774, %v845
          %847 = vmatmul.bf16.gmra.mxu0 %v811
          %v848 = vpop.f32.mrf.mxu0
          %v849 = vadd.f32 %v774, %v848
          %v850 = vpop.f32.mrf.mxu0
          %v851 = vadd.f32 %v774, %v850
          %852 = vmatmul.bf16.gmra.mxu0 %v812
          %v853 = vpop.f32.mrf.mxu0
          %v854 = vadd.f32 %v774, %v853
          %v855 = vpop.f32.mrf.mxu0
          %v856 = vadd.f32 %v774, %v855
          %857 = vmatmul.bf16.gmra.mxu0 %v813
          %v858 = vpop.f32.mrf.mxu0
          %v859 = vadd.f32 %v774, %v858
          %v860 = vpop.f32.mrf.mxu0
          %v861 = vadd.f32 %v774, %v860
          %862 = vmatmul.bf16.gmra.mxu0 %v814
          %v863 = vpop.f32.mrf.mxu0
          %v864 = vadd.f32 %v774, %v863
          %v865 = vpop.f32.mrf.mxu0
          %v866 = vadd.f32 %v774, %v865
          %867 = vmatmul.bf16.gmra.mxu0 %v815
          %v868 = vpop.f32.mrf.mxu0
          %v869 = vadd.f32 %v774, %v868
          %v870 = vpop.f32.mrf.mxu0
          %v871 = vadd.f32 %v774, %v870
          %872 = vdwg.mxu0
          %v873 = vld [vmem:[#allocation3] sm:$0xff]
          %v874 = vld [vmem:[#allocation3 + $0x8] sm:$0xff]
          %v875 = vld [vmem:[#allocation3 + $0x10] sm:$0xff]
          %v876 = vld [vmem:[#allocation3 + $0x18] sm:$0xff]
          %v877 = vld [vmem:[#allocation3 + $0x20] sm:$0xff]
          %v878 = vld [vmem:[#allocation3 + $0x28] sm:$0xff]
          %v879 = vld [vmem:[#allocation3 + $0x30] sm:$0xff]
          %v880 = vld [vmem:[#allocation3 + $0x38] sm:$0xff]
          %v881 = vld [vmem:[#allocation3 + $0x40] sm:$0xff]
          %v882 = vld [vmem:[#allocation3 + $0x48] sm:$0xff]
          %v883 = vld [vmem:[#allocation3 + $0x50] sm:$0xff]
          %v884 = vld [vmem:[#allocation3 + $0x58] sm:$0xff]
          %v885 = vld [vmem:[#allocation3 + $0x60] sm:$0xff]
          %v886 = vld [vmem:[#allocation3 + $0x68] sm:$0xff]
          %v887 = vld [vmem:[#allocation3 + $0x70] sm:$0xff]
          %v888 = vld [vmem:[#allocation3 + $0x78] sm:$0xff]
          %889 = vmax.xlane.f32.xlu0 %v834
          %v890 = vpop.xlane.xlu0 %889
          %891 = vmax.xlane.f32.xlu0 %v836
          %v892 = vpop.xlane.xlu0 %891
          %893 = vmax.xlane.f32.xlu0 %v839
          %v894 = vpop.xlane.xlu0 %893
          %895 = vmax.xlane.f32.xlu0 %v841
          %v896 = vpop.xlane.xlu0 %895
          %897 = vmax.xlane.f32.xlu0 %v844
          %v898 = vpop.xlane.xlu0 %897
          %899 = vmax.xlane.f32.xlu0 %v846
          %v900 = vpop.xlane.xlu0 %899
          %901 = vmax.xlane.f32.xlu0 %v849
          %v902 = vpop.xlane.xlu0 %901
          %903 = vmax.xlane.f32.xlu0 %v851
          %v904 = vpop.xlane.xlu0 %903
          %905 = vmax.xlane.f32.xlu0 %v854
          %v906 = vpop.xlane.xlu0 %905
          %907 = vmax.xlane.f32.xlu0 %v856
          %v908 = vpop.xlane.xlu0 %907
          %909 = vmax.xlane.f32.xlu0 %v859
          %v910 = vpop.xlane.xlu0 %909
          %911 = vmax.xlane.f32.xlu0 %v861
          %v912 = vpop.xlane.xlu0 %911
          %913 = vmax.xlane.f32.xlu0 %v864
          %v914 = vpop.xlane.xlu0 %913
          %915 = vmax.xlane.f32.xlu0 %v866
          %v916 = vpop.xlane.xlu0 %915
          %917 = vmax.xlane.f32.xlu0 %v869
          %v918 = vpop.xlane.xlu0 %917
          %919 = vmax.xlane.f32.xlu0 %v871
          %v920 = vpop.xlane.xlu0 %919
          %v921 = vmax.f32 %v873, %v890
          %v922 = vmax.f32 %v874, %v892
          %v923 = vmax.f32 %v875, %v894
          %v924 = vmax.f32 %v876, %v896
          %v925 = vmax.f32 %v877, %v898
          %v926 = vmax.f32 %v878, %v900
          %v927 = vmax.f32 %v879, %v902
          %v928 = vmax.f32 %v880, %v904
          %v929 = vmax.f32 %v881, %v906
          %v930 = vmax.f32 %v882, %v908
          %v931 = vmax.f32 %v883, %v910
          %v932 = vmax.f32 %v884, %v912
          %v933 = vmax.f32 %v885, %v914
          %v934 = vmax.f32 %v886, %v916
          %v935 = vmax.f32 %v887, %v918
          %v936 = vmax.f32 %v888, %v920
          %v937 = vsub.f32 %v873, %v921
          %v938 = vsub.f32 %v874, %v922
          %v939 = vsub.f32 %v875, %v923
          %v940 = vsub.f32 %v876, %v924
          %v941 = vsub.f32 %v877, %v925
          %v942 = vsub.f32 %v878, %v926
          %v943 = vsub.f32 %v879, %v927
          %v944 = vsub.f32 %v880, %v928
          %v945 = vsub.f32 %v881, %v929
          %v946 = vsub.f32 %v882, %v930
          %v947 = vsub.f32 %v883, %v931
          %v948 = vsub.f32 %v884, %v932
          %v949 = vsub.f32 %v885, %v933
          %v950 = vsub.f32 %v886, %v934
          %v951 = vsub.f32 %v887, %v935
          %v952 = vsub.f32 %v888, %v936
          %v953 = vmul.f32 %v937, 1.442695
          %v954 = vpow.pop %v953
          %v955 = vmul.f32 %v938, 1.442695
          %v956 = vpow.pop %v955
          %v957 = vmul.f32 %v939, 1.442695
          %v958 = vpow.pop %v957
          %v959 = vmul.f32 %v940, 1.442695
          %v960 = vpow.pop %v959
          %v961 = vmul.f32 %v941, 1.442695
          %v962 = vpow.pop %v961
          %v963 = vmul.f32 %v942, 1.442695
          %v964 = vpow.pop %v963
          %v965 = vmul.f32 %v943, 1.442695
          %v966 = vpow.pop %v965
          %v967 = vmul.f32 %v944, 1.442695
          %v968 = vpow.pop %v967
          %v969 = vmul.f32 %v945, 1.442695
          %v970 = vpow.pop %v969
          %v971 = vmul.f32 %v946, 1.442695
          %v972 = vpow.pop %v971
          %v973 = vmul.f32 %v947, 1.442695
          %v974 = vpow.pop %v973
          %v975 = vmul.f32 %v948, 1.442695
          %v976 = vpow.pop %v975
          %v977 = vmul.f32 %v949, 1.442695
          %v978 = vpow.pop %v977
          %v979 = vmul.f32 %v950, 1.442695
          %v980 = vpow.pop %v979
          %v981 = vmul.f32 %v951, 1.442695
          %v982 = vpow.pop %v981
          %v983 = vmul.f32 %v952, 1.442695
          %v984 = vpow.pop %v983
          %986 = vset.pattern.permute.xlu0 0
          %987 = vperm.xlu0 %986, %v921
          %v988 = vpop.permute.xlu0 %987
          %991 = vset.pattern.permute.xlu0 0
          %992 = vperm.xlu0 %991, %v922
          %v993 = vpop.permute.xlu0 %992
          %996 = vset.pattern.permute.xlu0 0
          %997 = vperm.xlu0 %996, %v923
          %v998 = vpop.permute.xlu0 %997
          %1001 = vset.pattern.permute.xlu0 0
          %1002 = vperm.xlu0 %1001, %v924
          %v1003 = vpop.permute.xlu0 %1002
          %1006 = vset.pattern.permute.xlu0 0
          %1007 = vperm.xlu0 %1006, %v925
          %v1008 = vpop.permute.xlu0 %1007
          %1011 = vset.pattern.permute.xlu0 0
          %1012 = vperm.xlu0 %1011, %v926
          %v1013 = vpop.permute.xlu0 %1012
          %1016 = vset.pattern.permute.xlu0 0
          %1017 = vperm.xlu0 %1016, %v927
          %v1018 = vpop.permute.xlu0 %1017
          %1021 = vset.pattern.permute.xlu0 0
          %1022 = vperm.xlu0 %1021, %v928
          %v1023 = vpop.permute.xlu0 %1022
          %1026 = vset.pattern.permute.xlu0 0
          %1027 = vperm.xlu0 %1026, %v929
          %v1028 = vpop.permute.xlu0 %1027
          %1031 = vset.pattern.permute.xlu0 0
          %1032 = vperm.xlu0 %1031, %v930
          %v1033 = vpop.permute.xlu0 %1032
          %1036 = vset.pattern.permute.xlu0 0
          %1037 = vperm.xlu0 %1036, %v931
          %v1038 = vpop.permute.xlu0 %1037
          %1041 = vset.pattern.permute.xlu0 0
          %1042 = vperm.xlu0 %1041, %v932
          %v1043 = vpop.permute.xlu0 %1042
          %1046 = vset.pattern.permute.xlu0 0
          %1047 = vperm.xlu0 %1046, %v933
          %v1048 = vpop.permute.xlu0 %1047
          %1051 = vset.pattern.permute.xlu0 0
          %1052 = vperm.xlu0 %1051, %v934
          %v1053 = vpop.permute.xlu0 %1052
          %1056 = vset.pattern.permute.xlu0 0
          %1057 = vperm.xlu0 %1056, %v935
          %v1058 = vpop.permute.xlu0 %1057
          %1061 = vset.pattern.permute.xlu0 0
          %1062 = vperm.xlu0 %1061, %v936
          %v1063 = vpop.permute.xlu0 %1062
          %v1065 = vsub.f32 %v834, %v988
          %v1066 = vsub.f32 %v836, %v993
          %v1067 = vsub.f32 %v839, %v998
          %v1068 = vsub.f32 %v841, %v1003
          %v1069 = vsub.f32 %v844, %v1008
          %v1070 = vsub.f32 %v846, %v1013
          %v1071 = vsub.f32 %v849, %v1018
          %v1072 = vsub.f32 %v851, %v1023
          %v1073 = vsub.f32 %v854, %v1028
          %v1074 = vsub.f32 %v856, %v1033
          %v1075 = vsub.f32 %v859, %v1038
          %v1076 = vsub.f32 %v861, %v1043
          %v1077 = vsub.f32 %v864, %v1048
          %v1078 = vsub.f32 %v866, %v1053
          %v1079 = vsub.f32 %v869, %v1058
          %v1080 = vsub.f32 %v871, %v1063
          %v1081 = vmul.f32 %v1065, 1.442695
          %v1082 = vpow.pop %v1081
          %v1083 = vmul.f32 %v1066, 1.442695
          %v1084 = vpow.pop %v1083
          %v1085 = vmul.f32 %v1067, 1.442695
          %v1086 = vpow.pop %v1085
          %v1087 = vmul.f32 %v1068, 1.442695
          %v1088 = vpow.pop %v1087
          %v1089 = vmul.f32 %v1069, 1.442695
          %v1090 = vpow.pop %v1089
          %v1091 = vmul.f32 %v1070, 1.442695
          %v1092 = vpow.pop %v1091
          %v1093 = vmul.f32 %v1071, 1.442695
          %v1094 = vpow.pop %v1093
          %v1095 = vmul.f32 %v1072, 1.442695
          %v1096 = vpow.pop %v1095
          %v1097 = vmul.f32 %v1073, 1.442695
          %v1098 = vpow.pop %v1097
          %v1099 = vmul.f32 %v1074, 1.442695
          %v1100 = vpow.pop %v1099
          %v1101 = vmul.f32 %v1075, 1.442695
          %v1102 = vpow.pop %v1101
          %v1103 = vmul.f32 %v1076, 1.442695
          %v1104 = vpow.pop %v1103
          %v1105 = vmul.f32 %v1077, 1.442695
          %v1106 = vpow.pop %v1105
          %v1107 = vmul.f32 %v1078, 1.442695
          %v1108 = vpow.pop %v1107
          %v1109 = vmul.f32 %v1079, 1.442695
          %v1110 = vpow.pop %v1109
          %v1111 = vmul.f32 %v1080, 1.442695
          %v1112 = vpow.pop %v1111
          %v1113 = vld [vmem:[#allocation4] sm:$0xff]
          %v1114 = vld [vmem:[#allocation4 + $0x8] sm:$0xff]
          %v1115 = vld [vmem:[#allocation4 + $0x10] sm:$0xff]
          %v1116 = vld [vmem:[#allocation4 + $0x18] sm:$0xff]
          %v1117 = vld [vmem:[#allocation4 + $0x20] sm:$0xff]
          %v1118 = vld [vmem:[#allocation4 + $0x28] sm:$0xff]
          %v1119 = vld [vmem:[#allocation4 + $0x30] sm:$0xff]
          %v1120 = vld [vmem:[#allocation4 + $0x38] sm:$0xff]
          %v1121 = vld [vmem:[#allocation4 + $0x40] sm:$0xff]
          %v1122 = vld [vmem:[#allocation4 + $0x48] sm:$0xff]
          %v1123 = vld [vmem:[#allocation4 + $0x50] sm:$0xff]
          %v1124 = vld [vmem:[#allocation4 + $0x58] sm:$0xff]
          %v1125 = vld [vmem:[#allocation4 + $0x60] sm:$0xff]
          %v1126 = vld [vmem:[#allocation4 + $0x68] sm:$0xff]
          %v1127 = vld [vmem:[#allocation4 + $0x70] sm:$0xff]
          %v1128 = vld [vmem:[#allocation4 + $0x78] sm:$0xff]
          %v1129 = vmul.f32 %v954, %v1113
          %v1130 = vmul.f32 %v956, %v1114
          %v1131 = vmul.f32 %v958, %v1115
          %v1132 = vmul.f32 %v960, %v1116
          %v1133 = vmul.f32 %v962, %v1117
          %v1134 = vmul.f32 %v964, %v1118
          %v1135 = vmul.f32 %v966, %v1119
          %v1136 = vmul.f32 %v968, %v1120
          %v1137 = vmul.f32 %v970, %v1121
          %v1138 = vmul.f32 %v972, %v1122
          %v1139 = vmul.f32 %v974, %v1123
          %v1140 = vmul.f32 %v976, %v1124
          %v1141 = vmul.f32 %v978, %v1125
          %v1142 = vmul.f32 %v980, %v1126
          %v1143 = vmul.f32 %v982, %v1127
          %v1144 = vmul.f32 %v984, %v1128
          %1145 = vadd.xlane.f32.xlu0 %v1082
          %v1146 = vpop.xlane.xlu0 %1145
          %1147 = vadd.xlane.f32.xlu0 %v1084
          %v1148 = vpop.xlane.xlu0 %1147
          %1149 = vadd.xlane.f32.xlu0 %v1086
          %v1150 = vpop.xlane.xlu0 %1149
          %1151 = vadd.xlane.f32.xlu0 %v1088
          %v1152 = vpop.xlane.xlu0 %1151
          %1153 = vadd.xlane.f32.xlu0 %v1090
          %v1154 = vpop.xlane.xlu0 %1153
          %1155 = vadd.xlane.f32.xlu0 %v1092
          %v1156 = vpop.xlane.xlu0 %1155
          %1157 = vadd.xlane.f32.xlu0 %v1094
          %v1158 = vpop.xlane.xlu0 %1157
          %1159 = vadd.xlane.f32.xlu0 %v1096
          %v1160 = vpop.xlane.xlu0 %1159
          %1161 = vadd.xlane.f32.xlu0 %v1098
          %v1162 = vpop.xlane.xlu0 %1161
          %1163 = vadd.xlane.f32.xlu0 %v1100
          %v1164 = vpop.xlane.xlu0 %1163
          %1165 = vadd.xlane.f32.xlu0 %v1102
          %v1166 = vpop.xlane.xlu0 %1165
          %1167 = vadd.xlane.f32.xlu0 %v1104
          %v1168 = vpop.xlane.xlu0 %1167
          %1169 = vadd.xlane.f32.xlu0 %v1106
          %v1170 = vpop.xlane.xlu0 %1169
          %1171 = vadd.xlane.f32.xlu0 %v1108
          %v1172 = vpop.xlane.xlu0 %1171
          %1173 = vadd.xlane.f32.xlu0 %v1110
          %v1174 = vpop.xlane.xlu0 %1173
          %1175 = vadd.xlane.f32.xlu0 %v1112
          %v1176 = vpop.xlane.xlu0 %1175
          %v1177 = vadd.f32 %v1129, %v1146
          %v1178 = vadd.f32 %v1130, %v1148
          %v1179 = vadd.f32 %v1131, %v1150
          %v1180 = vadd.f32 %v1132, %v1152
          %v1181 = vadd.f32 %v1133, %v1154
          %v1182 = vadd.f32 %v1134, %v1156
          %v1183 = vadd.f32 %v1135, %v1158
          %v1184 = vadd.f32 %v1136, %v1160
          %v1185 = vadd.f32 %v1137, %v1162
          %v1186 = vadd.f32 %v1138, %v1164
          %v1187 = vadd.f32 %v1139, %v1166
          %v1188 = vadd.f32 %v1140, %v1168
          %v1189 = vadd.f32 %v1141, %v1170
          %v1190 = vadd.f32 %v1142, %v1172
          %v1191 = vadd.f32 %v1143, %v1174
          %v1192 = vadd.f32 %v1144, %v1176
          %vm1193 = vcmask 7168
          %1194 = vst.msk [vmem:[#allocation4] sm:$0xff] %vm1193, %v1177
          %1195 = vst.msk [vmem:[#allocation4 + $0x8] sm:$0xff] %vm1193, %v1178
          %1196 = vst.msk [vmem:[#allocation4 + $0x10] sm:$0xff] %vm1193, %v1179
          %1197 = vst.msk [vmem:[#allocation4 + $0x18] sm:$0xff] %vm1193, %v1180
          %1198 = vst.msk [vmem:[#allocation4 + $0x20] sm:$0xff] %vm1193, %v1181
          %1199 = vst.msk [vmem:[#allocation4 + $0x28] sm:$0xff] %vm1193, %v1182
          %1200 = vst.msk [vmem:[#allocation4 + $0x30] sm:$0xff] %vm1193, %v1183
          %1201 = vst.msk [vmem:[#allocation4 + $0x38] sm:$0xff] %vm1193, %v1184
          %1202 = vst.msk [vmem:[#allocation4 + $0x40] sm:$0xff] %vm1193, %v1185
          %1203 = vst.msk [vmem:[#allocation4 + $0x48] sm:$0xff] %vm1193, %v1186
          %1204 = vst.msk [vmem:[#allocation4 + $0x50] sm:$0xff] %vm1193, %v1187
          %1205 = vst.msk [vmem:[#allocation4 + $0x58] sm:$0xff] %vm1193, %v1188
          %1206 = vst.msk [vmem:[#allocation4 + $0x60] sm:$0xff] %vm1193, %v1189
          %1207 = vst.msk [vmem:[#allocation4 + $0x68] sm:$0xff] %vm1193, %v1190
          %1208 = vst.msk [vmem:[#allocation4 + $0x70] sm:$0xff] %vm1193, %v1191
          %1209 = vst.msk [vmem:[#allocation4 + $0x78] sm:$0xff] %vm1193, %v1192
          %v1210 = vld [vmem:[#allocation5] sm:$0xff]
          %v1211 = vld [vmem:[#allocation5 + $0x8] sm:$0xff]
          %v1212 = vld [vmem:[#allocation5 + $0x10] sm:$0xff]
          %v1213 = vld [vmem:[#allocation5 + $0x18] sm:$0xff]
          %v1214 = vld [vmem:[#allocation5 + $0x20] sm:$0xff]
          %v1215 = vld [vmem:[#allocation5 + $0x28] sm:$0xff]
          %v1216 = vld [vmem:[#allocation5 + $0x30] sm:$0xff]
          %v1217 = vld [vmem:[#allocation5 + $0x38] sm:$0xff]
          %v1218 = vld [vmem:[#allocation5 + $0x40] sm:$0xff]
          %v1219 = vld [vmem:[#allocation5 + $0x48] sm:$0xff]
          %v1220 = vld [vmem:[#allocation5 + $0x50] sm:$0xff]
          %v1221 = vld [vmem:[#allocation5 + $0x58] sm:$0xff]
          %v1222 = vld [vmem:[#allocation5 + $0x60] sm:$0xff]
          %v1223 = vld [vmem:[#allocation5 + $0x68] sm:$0xff]
          %v1224 = vld [vmem:[#allocation5 + $0x70] sm:$0xff]
          %v1225 = vld [vmem:[#allocation5 + $0x78] sm:$0xff]
          %1227 = vset.pattern.permute.xlu0 0
          %1228 = vperm.xlu0 %1227, %v954
          %v1229 = vpop.permute.xlu0 %1228
          %1232 = vset.pattern.permute.xlu0 0
          %1233 = vperm.xlu0 %1232, %v956
          %v1234 = vpop.permute.xlu0 %1233
          %1237 = vset.pattern.permute.xlu0 0
          %1238 = vperm.xlu0 %1237, %v958
          %v1239 = vpop.permute.xlu0 %1238
          %1242 = vset.pattern.permute.xlu0 0
          %1243 = vperm.xlu0 %1242, %v960
          %v1244 = vpop.permute.xlu0 %1243
          %1247 = vset.pattern.permute.xlu0 0
          %1248 = vperm.xlu0 %1247, %v962
          %v1249 = vpop.permute.xlu0 %1248
          %1252 = vset.pattern.permute.xlu0 0
          %1253 = vperm.xlu0 %1252, %v964
          %v1254 = vpop.permute.xlu0 %1253
          %1257 = vset.pattern.permute.xlu0 0
          %1258 = vperm.xlu0 %1257, %v966
          %v1259 = vpop.permute.xlu0 %1258
          %1262 = vset.pattern.permute.xlu0 0
          %1263 = vperm.xlu0 %1262, %v968
          %v1264 = vpop.permute.xlu0 %1263
          %1267 = vset.pattern.permute.xlu0 0
          %1268 = vperm.xlu0 %1267, %v970
          %v1269 = vpop.permute.xlu0 %1268
          %1272 = vset.pattern.permute.xlu0 0
          %1273 = vperm.xlu0 %1272, %v972
          %v1274 = vpop.permute.xlu0 %1273
          %1277 = vset.pattern.permute.xlu0 0
          %1278 = vperm.xlu0 %1277, %v974
          %v1279 = vpop.permute.xlu0 %1278
          %1282 = vset.pattern.permute.xlu0 0
          %1283 = vperm.xlu0 %1282, %v976
          %v1284 = vpop.permute.xlu0 %1283
          %1287 = vset.pattern.permute.xlu0 0
          %1288 = vperm.xlu0 %1287, %v978
          %v1289 = vpop.permute.xlu0 %1288
          %1292 = vset.pattern.permute.xlu0 0
          %1293 = vperm.xlu0 %1292, %v980
          %v1294 = vpop.permute.xlu0 %1293
          %1297 = vset.pattern.permute.xlu0 0
          %1298 = vperm.xlu0 %1297, %v982
          %v1299 = vpop.permute.xlu0 %1298
          %1302 = vset.pattern.permute.xlu0 0
          %1303 = vperm.xlu0 %1302, %v984
          %v1304 = vpop.permute.xlu0 %1303
          %v1306 = vmul.f32 %v1229, %v1210
          %v1307 = vmul.f32 %v1234, %v1211
          %v1308 = vmul.f32 %v1239, %v1212
          %v1309 = vmul.f32 %v1244, %v1213
          %v1310 = vmul.f32 %v1249, %v1214
          %v1311 = vmul.f32 %v1254, %v1215
          %v1312 = vmul.f32 %v1259, %v1216
          %v1313 = vmul.f32 %v1264, %v1217
          %v1314 = vmul.f32 %v1269, %v1218
          %v1315 = vmul.f32 %v1274, %v1219
          %v1316 = vmul.f32 %v1279, %v1220
          %v1317 = vmul.f32 %v1284, %v1221
          %v1318 = vmul.f32 %v1289, %v1222
          %v1319 = vmul.f32 %v1294, %v1223
          %v1320 = vmul.f32 %v1299, %v1224
          %v1321 = vmul.f32 %v1304, %v1225
          %v1322 = vpack.c.bf16 %v1084, %v1082
          %v1323 = vpack.c.bf16 %v1088, %v1086
          %v1324 = vpack.c.bf16 %v1092, %v1090
          %v1325 = vpack.c.bf16 %v1096, %v1094
          %v1326 = vpack.c.bf16 %v1100, %v1098
          %v1327 = vpack.c.bf16 %v1104, %v1102
          %v1328 = vpack.c.bf16 %v1108, %v1106
          %v1329 = vpack.c.bf16 %v1112, %v1110
          %1330 = vmatpush.bf16.msra.mxu0 %v755
          %1331 = vmatpush.bf16.msra.mxu0 %v754
          %1332 = vmatpush.bf16.msra.mxu0 %v753
          %1333 = vmatpush.bf16.msra.mxu0 %v752
          %1334 = vmatpush.bf16.msra.mxu0 %v751
          %1335 = vmatpush.bf16.msra.mxu0 %v750
          %1336 = vmatpush.bf16.msra.mxu0 %v749
          %1337 = vmatpush.bf16.msra.mxu0 %v748
          %1338 = vmatmul.bf16.gmra.mxu0 %v1322
          %v1339 = vpop.f32.mrf.mxu0
          %v1340 = vadd.f32 0.0, %v1339
          %v1341 = vpop.f32.mrf.mxu0
          %v1342 = vadd.f32 0.0, %v1341
          %1343 = vmatmul.bf16.gmra.mxu0 %v1323
          %v1344 = vpop.f32.mrf.mxu0
          %v1345 = vadd.f32 0.0, %v1344
          %v1346 = vpop.f32.mrf.mxu0
          %v1347 = vadd.f32 0.0, %v1346
          %1348 = vmatmul.bf16.gmra.mxu0 %v1324
          %v1349 = vpop.f32.mrf.mxu0
          %v1350 = vadd.f32 0.0, %v1349
          %v1351 = vpop.f32.mrf.mxu0
          %v1352 = vadd.f32 0.0, %v1351
          %1353 = vmatmul.bf16.gmra.mxu0 %v1325
          %v1354 = vpop.f32.mrf.mxu0
          %v1355 = vadd.f32 0.0, %v1354
          %v1356 = vpop.f32.mrf.mxu0
          %v1357 = vadd.f32 0.0, %v1356
          %1358 = vmatmul.bf16.gmra.mxu0 %v1326
          %v1359 = vpop.f32.mrf.mxu0
          %v1360 = vadd.f32 0.0, %v1359
          %v1361 = vpop.f32.mrf.mxu0
          %v1362 = vadd.f32 0.0, %v1361
          %1363 = vmatmul.bf16.gmra.mxu0 %v1327
          %v1364 = vpop.f32.mrf.mxu0
          %v1365 = vadd.f32 0.0, %v1364
          %v1366 = vpop.f32.mrf.mxu0
          %v1367 = vadd.f32 0.0, %v1366
          %1368 = vmatmul.bf16.gmra.mxu0 %v1328
          %v1369 = vpop.f32.mrf.mxu0
          %v1370 = vadd.f32 0.0, %v1369
          %v1371 = vpop.f32.mrf.mxu0
          %v1372 = vadd.f32 0.0, %v1371
          %1373 = vmatmul.bf16.gmra.mxu0 %v1329
          %v1374 = vpop.f32.mrf.mxu0
          %v1375 = vadd.f32 0.0, %v1374
          %v1376 = vpop.f32.mrf.mxu0
          %v1377 = vadd.f32 0.0, %v1376
          %1378 = vdwg.mxu0
          %v1379 = vadd.f32 %v1306, %v1340
          %v1380 = vadd.f32 %v1307, %v1342
          %v1381 = vadd.f32 %v1308, %v1345
          %v1382 = vadd.f32 %v1309, %v1347
          %v1383 = vadd.f32 %v1310, %v1350
          %v1384 = vadd.f32 %v1311, %v1352
          %v1385 = vadd.f32 %v1312, %v1355
          %v1386 = vadd.f32 %v1313, %v1357
          %v1387 = vadd.f32 %v1314, %v1360
          %v1388 = vadd.f32 %v1315, %v1362
          %v1389 = vadd.f32 %v1316, %v1365
          %v1390 = vadd.f32 %v1317, %v1367
          %v1391 = vadd.f32 %v1318, %v1370
          %v1392 = vadd.f32 %v1319, %v1372
          %v1393 = vadd.f32 %v1320, %v1375
          %v1394 = vadd.f32 %v1321, %v1377
          %1395 = vst [vmem:[#allocation5] sm:$0xff] %v1379
          %1396 = vst [vmem:[#allocation5 + $0x8] sm:$0xff] %v1380
          %1397 = vst [vmem:[#allocation5 + $0x10] sm:$0xff] %v1381
          %1398 = vst [vmem:[#allocation5 + $0x18] sm:$0xff] %v1382
          %1399 = vst [vmem:[#allocation5 + $0x20] sm:$0xff] %v1383
          %1400 = vst [vmem:[#allocation5 + $0x28] sm:$0xff] %v1384
          %1401 = vst [vmem:[#allocation5 + $0x30] sm:$0xff] %v1385
          %1402 = vst [vmem:[#allocation5 + $0x38] sm:$0xff] %v1386
          %1403 = vst [vmem:[#allocation5 + $0x40] sm:$0xff] %v1387
          %1404 = vst [vmem:[#allocation5 + $0x48] sm:$0xff] %v1388
          %1405 = vst [vmem:[#allocation5 + $0x50] sm:$0xff] %v1389
          %1406 = vst [vmem:[#allocation5 + $0x58] sm:$0xff] %v1390
          %1407 = vst [vmem:[#allocation5 + $0x60] sm:$0xff] %v1391
          %1408 = vst [vmem:[#allocation5 + $0x68] sm:$0xff] %v1392
          %1409 = vst [vmem:[#allocation5 + $0x70] sm:$0xff] %v1393
          %1410 = vst [vmem:[#allocation5 + $0x78] sm:$0xff] %v1394
          %1411 = vst.msk [vmem:[#allocation3] sm:$0xff] %vm1193, %v921
          %1412 = vst.msk [vmem:[#allocation3 + $0x8] sm:$0xff] %vm1193, %v922
          %1413 = vst.msk [vmem:[#allocation3 + $0x10] sm:$0xff] %vm1193, %v923
          %1414 = vst.msk [vmem:[#allocation3 + $0x18] sm:$0xff] %vm1193, %v924
          %1415 = vst.msk [vmem:[#allocation3 + $0x20] sm:$0xff] %vm1193, %v925
          %1416 = vst.msk [vmem:[#allocation3 + $0x28] sm:$0xff] %vm1193, %v926
          %1417 = vst.msk [vmem:[#allocation3 + $0x30] sm:$0xff] %vm1193, %v927
          %1418 = vst.msk [vmem:[#allocation3 + $0x38] sm:$0xff] %vm1193, %v928
          %1419 = vst.msk [vmem:[#allocation3 + $0x40] sm:$0xff] %vm1193, %v929
          %1420 = vst.msk [vmem:[#allocation3 + $0x48] sm:$0xff] %vm1193, %v930
          %1421 = vst.msk [vmem:[#allocation3 + $0x50] sm:$0xff] %vm1193, %v931
          %1422 = vst.msk [vmem:[#allocation3 + $0x58] sm:$0xff] %vm1193, %v932
          %1423 = vst.msk [vmem:[#allocation3 + $0x60] sm:$0xff] %vm1193, %v933
          %1424 = vst.msk [vmem:[#allocation3 + $0x68] sm:$0xff] %vm1193, %v934
          %1425 = vst.msk [vmem:[#allocation3 + $0x70] sm:$0xff] %vm1193, %v935
          %1426 = vst.msk [vmem:[#allocation3 + $0x78] sm:$0xff] %vm1193, %v936
        $region48: #{tpu_custom_call.1} parent=39 // pred_fallthru
          _
        // Predicated region
        $region49: #{tpu_custom_call.1} parent=39 // pred_check
          %p1427 = pneg %p315
        $region50: #{tpu_custom_call.1} parent=39 // pred_check_branch
          %1429 = sbr.rel (%p1427) target = $region52
        $region51: #{tpu_custom_call.1} parent=39 // pred_region
          %v1430 = vld [vmem:[#allocation4] sm:$0xff]
          %v1431 = vld [vmem:[#allocation4 + $0x8] sm:$0xff]
          %v1432 = vld [vmem:[#allocation4 + $0x10] sm:$0xff]
          %v1433 = vld [vmem:[#allocation4 + $0x18] sm:$0xff]
          %v1434 = vld [vmem:[#allocation4 + $0x20] sm:$0xff]
          %v1435 = vld [vmem:[#allocation4 + $0x28] sm:$0xff]
          %v1436 = vld [vmem:[#allocation4 + $0x30] sm:$0xff]
          %v1437 = vld [vmem:[#allocation4 + $0x38] sm:$0xff]
          %v1438 = vld [vmem:[#allocation4 + $0x40] sm:$0xff]
          %v1439 = vld [vmem:[#allocation4 + $0x48] sm:$0xff]
          %v1440 = vld [vmem:[#allocation4 + $0x50] sm:$0xff]
          %v1441 = vld [vmem:[#allocation4 + $0x58] sm:$0xff]
          %v1442 = vld [vmem:[#allocation4 + $0x60] sm:$0xff]
          %v1443 = vld [vmem:[#allocation4 + $0x68] sm:$0xff]
          %v1444 = vld [vmem:[#allocation4 + $0x70] sm:$0xff]
          %v1445 = vld [vmem:[#allocation4 + $0x78] sm:$0xff]
          %v1446 = vrcp.pop %v1430
          %v1447 = vrcp.pop %v1431
          %v1448 = vrcp.pop %v1432
          %v1449 = vrcp.pop %v1433
          %v1450 = vrcp.pop %v1434
          %v1451 = vrcp.pop %v1435
          %v1452 = vrcp.pop %v1436
          %v1453 = vrcp.pop %v1437
          %v1454 = vrcp.pop %v1438
          %v1455 = vrcp.pop %v1439
          %v1456 = vrcp.pop %v1440
          %v1457 = vrcp.pop %v1441
          %v1458 = vrcp.pop %v1442
          %v1459 = vrcp.pop %v1443
          %v1460 = vrcp.pop %v1444
          %v1461 = vrcp.pop %v1445
          %v1462 = vld [vmem:[#allocation5] sm:$0xff]
          %v1463 = vld [vmem:[#allocation5 + $0x8] sm:$0xff]
          %v1464 = vld [vmem:[#allocation5 + $0x10] sm:$0xff]
          %v1465 = vld [vmem:[#allocation5 + $0x18] sm:$0xff]
          %v1466 = vld [vmem:[#allocation5 + $0x20] sm:$0xff]
          %v1467 = vld [vmem:[#allocation5 + $0x28] sm:$0xff]
          %v1468 = vld [vmem:[#allocation5 + $0x30] sm:$0xff]
          %v1469 = vld [vmem:[#allocation5 + $0x38] sm:$0xff]
          %v1470 = vld [vmem:[#allocation5 + $0x40] sm:$0xff]
          %v1471 = vld [vmem:[#allocation5 + $0x48] sm:$0xff]
          %v1472 = vld [vmem:[#allocation5 + $0x50] sm:$0xff]
          %v1473 = vld [vmem:[#allocation5 + $0x58] sm:$0xff]
          %v1474 = vld [vmem:[#allocation5 + $0x60] sm:$0xff]
          %v1475 = vld [vmem:[#allocation5 + $0x68] sm:$0xff]
          %v1476 = vld [vmem:[#allocation5 + $0x70] sm:$0xff]
          %v1477 = vld [vmem:[#allocation5 + $0x78] sm:$0xff]
          %1479 = vset.pattern.permute.xlu0 0
          %1480 = vperm.xlu0 %1479, %v1446
          %v1481 = vpop.permute.xlu0 %1480
          %1484 = vset.pattern.permute.xlu0 0
          %1485 = vperm.xlu0 %1484, %v1447
          %v1486 = vpop.permute.xlu0 %1485
          %1489 = vset.pattern.permute.xlu0 0
          %1490 = vperm.xlu0 %1489, %v1448
          %v1491 = vpop.permute.xlu0 %1490
          %1494 = vset.pattern.permute.xlu0 0
          %1495 = vperm.xlu0 %1494, %v1449
          %v1496 = vpop.permute.xlu0 %1495
          %1499 = vset.pattern.permute.xlu0 0
          %1500 = vperm.xlu0 %1499, %v1450
          %v1501 = vpop.permute.xlu0 %1500
          %1504 = vset.pattern.permute.xlu0 0
          %1505 = vperm.xlu0 %1504, %v1451
          %v1506 = vpop.permute.xlu0 %1505
          %1509 = vset.pattern.permute.xlu0 0
          %1510 = vperm.xlu0 %1509, %v1452
          %v1511 = vpop.permute.xlu0 %1510
          %1514 = vset.pattern.permute.xlu0 0
          %1515 = vperm.xlu0 %1514, %v1453
          %v1516 = vpop.permute.xlu0 %1515
          %1519 = vset.pattern.permute.xlu0 0
          %1520 = vperm.xlu0 %1519, %v1454
          %v1521 = vpop.permute.xlu0 %1520
          %1524 = vset.pattern.permute.xlu0 0
          %1525 = vperm.xlu0 %1524, %v1455
          %v1526 = vpop.permute.xlu0 %1525
          %1529 = vset.pattern.permute.xlu0 0
          %1530 = vperm.xlu0 %1529, %v1456
          %v1531 = vpop.permute.xlu0 %1530
          %1534 = vset.pattern.permute.xlu0 0
          %1535 = vperm.xlu0 %1534, %v1457
          %v1536 = vpop.permute.xlu0 %1535
          %1539 = vset.pattern.permute.xlu0 0
          %1540 = vperm.xlu0 %1539, %v1458
          %v1541 = vpop.permute.xlu0 %1540
          %1544 = vset.pattern.permute.xlu0 0
          %1545 = vperm.xlu0 %1544, %v1459
          %v1546 = vpop.permute.xlu0 %1545
          %1549 = vset.pattern.permute.xlu0 0
          %1550 = vperm.xlu0 %1549, %v1460
          %v1551 = vpop.permute.xlu0 %1550
          %1554 = vset.pattern.permute.xlu0 0
          %1555 = vperm.xlu0 %1554, %v1461
          %v1556 = vpop.permute.xlu0 %1555
          %v1558 = vmul.f32 %v1462, %v1481
          %v1559 = vmul.f32 %v1463, %v1486
          %v1560 = vmul.f32 %v1464, %v1491
          %v1561 = vmul.f32 %v1465, %v1496
          %v1562 = vmul.f32 %v1466, %v1501
          %v1563 = vmul.f32 %v1467, %v1506
          %v1564 = vmul.f32 %v1468, %v1511
          %v1565 = vmul.f32 %v1469, %v1516
          %v1566 = vmul.f32 %v1470, %v1521
          %v1567 = vmul.f32 %v1471, %v1526
          %v1568 = vmul.f32 %v1472, %v1531
          %v1569 = vmul.f32 %v1473, %v1536
          %v1570 = vmul.f32 %v1474, %v1541
          %v1571 = vmul.f32 %v1475, %v1546
          %v1572 = vmul.f32 %v1476, %v1551
          %v1573 = vmul.f32 %v1477, %v1556
          %1574 = vst [vmem:[%s288] sm:$0xff] %v1558
          %1575 = vst [vmem:[%s288 + $0x8] sm:$0xff] %v1559
          %1576 = vst [vmem:[%s288 + $0x10] sm:$0xff] %v1560
          %1577 = vst [vmem:[%s288 + $0x18] sm:$0xff] %v1561
          %1578 = vst [vmem:[%s288 + $0x20] sm:$0xff] %v1562
          %1579 = vst [vmem:[%s288 + $0x28] sm:$0xff] %v1563
          %1580 = vst [vmem:[%s288 + $0x30] sm:$0xff] %v1564
          %1581 = vst [vmem:[%s288 + $0x38] sm:$0xff] %v1565
          %1582 = vst [vmem:[%s288 + $0x40] sm:$0xff] %v1566
          %1583 = vst [vmem:[%s288 + $0x48] sm:$0xff] %v1567
          %1584 = vst [vmem:[%s288 + $0x50] sm:$0xff] %v1568
          %1585 = vst [vmem:[%s288 + $0x58] sm:$0xff] %v1569
          %1586 = vst [vmem:[%s288 + $0x60] sm:$0xff] %v1570
          %1587 = vst [vmem:[%s288 + $0x68] sm:$0xff] %v1571
          %1588 = vst [vmem:[%s288 + $0x70] sm:$0xff] %v1572
          %1589 = vst [vmem:[%s288 + $0x78] sm:$0xff] %v1573
        $region52: #{tpu_custom_call.1} parent=39 // pred_fallthru
          _
        %s1590 = sand.u32 %s174, 1
        %s1591 = scalar_lea.sflag [#allocation9], %s1590
        %s1592 = sand.u32 %s174, 1
        %s1593 = smul.addr %s1592, 128
        %s1594 = scalar_lea.vmem [#allocation8], %s1593
        // Predicated region
        $region53: #{tpu_custom_call.1} parent=39 // pred_check
          %p1595 = pneg %p184
        $region54: #{tpu_custom_call.1} parent=39 // pred_check_branch
          %1597 = sbr.rel (%p1595) target = $region56
        $region55: #{tpu_custom_call.1} parent=39 // pred_region
          %s1598 = smul.u32 16, %s27
          %1600 = vsyncadd %s1591, 0
          %s1601 = smul.addr %s26, 16
          %s1602 = sadd.s32 %s1598, %s1601
          %s1603 = smul.addr %s1602, 8
          %s1604 = scalar_lea.hbm %s6, %s1603
          %s1605 = sshll.u32 %s1594, 4
          %s1606 = int_to_ptr.vmem [resolvable:$true] %s1605
          %s1607 = sshll.u32 %s1604, 4
          %s1608 = int_to_ptr.hbm [resolvable:$true] %s1607
          %1613 = dma.vmem_to_hbm [thread:$0]  %s1606, 2048, %s1608, %s1591, 128, 128, 8
        $region56: #{tpu_custom_call.1} parent=39 // pred_fallthru
          _
      $region40: #{tpu_custom_call.1} parent=5 // pred_fallthru
        _
      %p1614 = scmp.le.s32.totalorder 2, %s16
      // Predicated region
      $region57: #{tpu_custom_call.1} parent=5 // pred_check
        %p1615 = pneg %p1614
      $region58: #{tpu_custom_call.1} parent=5 // pred_check_branch
        %1617 = sbr.rel (%p1615) target = $region60
      $region59: #{tpu_custom_call.1} parent=5 // pred_region
        %s1618 = ssub.s32 %s16, 2
        // Predicated region
        $region61: #{tpu_custom_call.1} parent=59 // pred_check
          %p1619 = pneg %p190
        $region62: #{tpu_custom_call.1} parent=59 // pred_check_branch
          %1621 = sbr.rel (%p1619) target = $region64
        $region63: #{tpu_custom_call.1} parent=59 // pred_region
          %s1622 = sand.u32 %s175, 1
          %s1623 = scalar_lea.sflag [#allocation9], %s1622
          %s1624 = sand.u32 %s175, 1
          %s1625 = smul.addr %s1624, 128
          %s1626 = scalar_lea.vmem [#allocation8], %s1625
          %1628 = dma.done %s1623, 2048
        $region64: #{tpu_custom_call.1} parent=59 // pred_fallthru
          _
      $region60: #{tpu_custom_call.1} parent=5 // pred_fallthru
        _
    $region6: #{tpu_custom_call.1} parent=1 // loop_footer
      %s20 = sadd.s32 1, %s16
    $region7: #{tpu_custom_call.1} parent=1 // loop_footer_branch
      %15 = sbr.rel target = $region3
    $region8: #{tpu_custom_call.1} parent=1 // loop_exit
      _
    %1629 = vsyncpa [#allocation9], 1
    %s1630 = scalar_lea.sflag [#allocation9], 1
    %1631 = vsyncpa %s1630, 1

</llo_original>
